<compile_context>
chip_gen: v7x
topology: tpu7x:2x2x1
jax: 0.10.0
libtpu: 0.0.40
codegen_flags: <defaults>
</compile_context>

<pallas_src>
import jax
import jax.numpy as jnp
from jax import lax
from jax.experimental import pallas as pl
from jax.experimental.pallas import tpu as pltpu  # noqa: F401  (TPU backend)

EPS = 1e-3


def _bn_kernel(x_ref, gamma_ref, beta_ref, o_ref):
    # x_ref: (N, C, HW) f32 slab; gamma_ref/beta_ref: (1, C, 1)
    x = x_ref[...]
    cnt = x.shape[0] * x.shape[2]                     # static reduce count (N*H*W)

    # One read of x: sum and sum-of-squares per channel (XLU lane reduce).
    s = jnp.sum(x, axis=(0, 2), keepdims=True)        # (1, C, 1)
    ss = jnp.sum(x * x, axis=(0, 2), keepdims=True)   # (1, C, 1)

    inv_cnt = 1.0 / cnt                               # compile-time constant
    mean = s * inv_cnt
    var = jnp.maximum(ss * inv_cnt - mean * mean, 0.0)  # biased batch variance
    inv_std = lax.rsqrt(var + EPS)                    # EUP slot

    # Fold affine into per-channel scale/shift (cheap: operates on (1, C, 1)).
    scale = gamma_ref[...] * inv_std
    shift = beta_ref[...] - mean * scale

    # Single normalize pass: 2 VPU ops per element.
    o_ref[...] = x * scale + shift


def batchnorm2d_pallas(x_nchw, gamma, beta):
    """x_nchw: (N, C, H, W) float32; gamma/beta: (C,) float32."""
    n, c, h, w = x_nchw.shape
    hw = h * w

    # Free reshapes -- data stays NCHW-contiguous, no transposes.
    x3d = x_nchw.reshape(n, c, hw)
    gamma3d = gamma.reshape(1, c, 1)
    beta3d = beta.reshape(1, c, 1)

    out3d = pl.pallas_call(
        _bn_kernel,
        out_shape=jax.ShapeDtypeStruct((n, c, hw), x3d.dtype),
    )(x3d, gamma3d, beta3d)

    return out3d.reshape(n, c, h, w)


if __name__ == "__main__":
    key = jax.random.PRNGKey(0)
    kx, kg, kb = jax.random.split(key, 3)

    # Shapes implied by the module: BatchNorm2d(384) over a (1, 384, 14, 14) input.
    N, C, H, W = 1, 384, 14, 14
    x = jax.random.normal(kx, (N, C, H, W), dtype=jnp.float32)

    # Deterministic affine parameters (BatchNorm2d(384) weight/bias).
    gamma = 1.0 + 0.1 * jax.random.normal(kg, (C,), dtype=jnp.float32)
    beta = 0.1 * jax.random.normal(kb, (C,), dtype=jnp.float32)

    out = batchnorm2d_pallas(x, gamma, beta)
    out = jax.block_until_ready(out)

    # Plain-JAX reference of training-mode BatchNorm2d forward.
    mean = jnp.mean(x, axis=(0, 2, 3), keepdims=True)
    var = jnp.mean((x - mean) ** 2, axis=(0, 2, 3), keepdims=True)
    ref = (x - mean) / jnp.sqrt(var + EPS) * gamma.reshape(1, C, 1, 1) + beta.reshape(1, C, 1, 1)
    assert jnp.allclose(out, ref, atol=1e-4, rtol=1e-4), "mismatch vs reference"

    print("KERNEL_OK")
</pallas_src>

<mosaic_0001>
module attributes {stable_mosaic.version = 11 : i64} {
  func.func @_bn_kernel(%arg0: memref<1x384x196xf32, #tpu.memory_space<vmem>>, %arg1: memref<1x384x1xf32, #tpu.memory_space<vmem>>, %arg2: memref<1x384x1xf32, #tpu.memory_space<vmem>>, %arg3: memref<1x384x196xf32, #tpu.memory_space<vmem>>) attributes {dimension_semantics = [], scalar_prefetch = 0 : i64, scratch_operands = 0 : i64, tpu.core_type = #tpu.core_type<tc>} {
    %c0 = arith.constant 0 : index
    %c0_0 = arith.constant 0 : index
    %c0_1 = arith.constant 0 : index
    %0 = vector.load %arg0[%c0, %c0_0, %c0_1] : memref<1x384x196xf32, #tpu.memory_space<vmem>>, vector<1x384x196xf32>
    %cst = arith.constant dense<0.000000e+00> : vector<384xf32>
    %1 = vector.multi_reduction <add>, %0, %cst [0, 2] : vector<1x384x196xf32> to vector<384xf32>
    %2 = vector.shape_cast %1 : vector<384xf32> to vector<1x384x1xf32>
    %3 = arith.mulf %0, %0 : vector<1x384x196xf32>
    %cst_2 = arith.constant dense<0.000000e+00> : vector<384xf32>
    %4 = vector.multi_reduction <add>, %3, %cst_2 [0, 2] : vector<1x384x196xf32> to vector<384xf32>
    %5 = vector.shape_cast %4 : vector<384xf32> to vector<1x384x1xf32>
    %cst_3 = arith.constant 0.00510204071 : f32
    %6 = vector.broadcast %cst_3 : f32 to vector<1x384x1xf32>
    %7 = arith.mulf %2, %6 : vector<1x384x1xf32>
    %cst_4 = arith.constant 0.00510204071 : f32
    %8 = vector.broadcast %cst_4 : f32 to vector<1x384x1xf32>
    %9 = arith.mulf %5, %8 : vector<1x384x1xf32>
    %10 = arith.mulf %7, %7 : vector<1x384x1xf32>
    %11 = arith.subf %9, %10 : vector<1x384x1xf32>
    %cst_5 = arith.constant 0.000000e+00 : f32
    %12 = vector.broadcast %cst_5 : f32 to vector<1x384x1xf32>
    %13 = arith.maximumf %11, %12 : vector<1x384x1xf32>
    %cst_6 = arith.constant 1.000000e-03 : f32
    %14 = vector.broadcast %cst_6 : f32 to vector<1x384x1xf32>
    %15 = arith.addf %13, %14 : vector<1x384x1xf32>
    %16 = math.rsqrt %15 : vector<1x384x1xf32>
    %c0_7 = arith.constant 0 : index
    %c0_8 = arith.constant 0 : index
    %c0_9 = arith.constant 0 : index
    %17 = vector.load %arg1[%c0_7, %c0_8, %c0_9] : memref<1x384x1xf32, #tpu.memory_space<vmem>>, vector<1x384x1xf32>
    %18 = arith.mulf %17, %16 : vector<1x384x1xf32>
    %c0_10 = arith.constant 0 : index
    %c0_11 = arith.constant 0 : index
    %c0_12 = arith.constant 0 : index
    %19 = vector.load %arg2[%c0_10, %c0_11, %c0_12] : memref<1x384x1xf32, #tpu.memory_space<vmem>>, vector<1x384x1xf32>
    %20 = arith.mulf %7, %18 : vector<1x384x1xf32>
    %21 = arith.subf %19, %20 : vector<1x384x1xf32>
    %22 = vector.broadcast %18 : vector<1x384x1xf32> to vector<1x384x196xf32>
    %23 = arith.mulf %0, %22 : vector<1x384x196xf32>
    %24 = vector.broadcast %21 : vector<1x384x1xf32> to vector<1x384x196xf32>
    %25 = arith.addf %23, %24 : vector<1x384x196xf32>
    %c0_13 = arith.constant 0 : index
    %c0_14 = arith.constant 0 : index
    %c0_15 = arith.constant 0 : index
    %26 = vector.load %arg3[%c0_13, %c0_14, %c0_15] : memref<1x384x196xf32, #tpu.memory_space<vmem>>, vector<1x384x196xf32>
    tpu.vector_store %arg3[%c0_13, %c0_14, %c0_15], %25 {strides = array<i32>} : memref<1x384x196xf32, #tpu.memory_space<vmem>>, vector<1x384x196xf32>,
    return
  }
}

</mosaic_0001>

<llo_original>
// kernel: tpu_custom_call.1
$region0: #{tpu_custom_call.1}
  #allocation0 [shape = 'u32[]', space=smem, size = 0x4, offset = 0x4, fixed_abs, tag = 'smem constant byte address 0x4 - core index']
  #allocation1 [shape = 'u32[144,128]{1,0:T(1,128)}', space=vmem, size = 0x12000, scoped, tag = 'internal scratch']
  %s0 = inlined_call_operand.vmem [shape: f32[1,384,196], index: 0, kind: input, shape index: {}]
  %s1 = inlined_call_operand.vmem [shape: f32[1,384,1], index: 1, kind: input, shape index: {}]
  %s2 = inlined_call_operand.vmem [shape: f32[1,384,1], index: 2, kind: input, shape index: {}]
  %s3 = inlined_call_operand.vmem [shape: f32[1,384,196], index: 3, kind: output, shape index: {}]
  %s4 = sld [smem:[#allocation0]]
  $region22: #{tpu_custom_call.1} parent=0
    _
  %s6 = ssub.s32 1, %s4
  %s7 = scalar_select 0, %s6, %s4
  // Predicated region
  $region2: #{tpu_custom_call.1} parent=0 // pred_check
    _
  $region3: #{tpu_custom_call.1} parent=0 // pred_check_branch
    %9 = sbr.rel (0) target = $region5
  $region4: #{tpu_custom_call.1} parent=0 // pred_region
    _
  $region5: #{tpu_custom_call.1} parent=0 // pred_fallthru
    _
  // Predicated region
  $region6: #{tpu_custom_call.1} parent=0 // pred_check
    _
  $region7: #{tpu_custom_call.1} parent=0 // pred_check_branch
    %11 = sbr.rel (0) target = $region9
  $region8: #{tpu_custom_call.1} parent=0 // pred_region
    _
  $region9: #{tpu_custom_call.1} parent=0 // pred_fallthru
    _
  // Predicated region
  $region10: #{tpu_custom_call.1} parent=0 // pred_check
    _
  $region11: #{tpu_custom_call.1} parent=0 // pred_check_branch
    %13 = sbr.rel (0) target = $region13
  $region12: #{tpu_custom_call.1} parent=0 // pred_region
    _
  $region13: #{tpu_custom_call.1} parent=0 // pred_fallthru
    _
  %v14 = vld [vmem:[%s0] sm:$0xff]
  %v15 = vld [vmem:[%s0 + $0x8] sm:$0xff]
  %v16 = vld [vmem:[%s0 + $0x10] sm:$0xff]
  %v17 = vld [vmem:[%s0 + $0x18] sm:$0xff]
  %v18 = vld [vmem:[%s0 + $0x20] sm:$0xff]
  %v19 = vld [vmem:[%s0 + $0x28] sm:$0xff]
  %v20 = vld [vmem:[%s0 + $0x30] sm:$0xff]
  %v21 = vld [vmem:[%s0 + $0x38] sm:$0xff]
  %v22 = vld [vmem:[%s0 + $0x40] sm:$0xff]
  %v23 = vld [vmem:[%s0 + $0x48] sm:$0xff]
  %v24 = vld [vmem:[%s0 + $0x50] sm:$0xff]
  %v25 = vld [vmem:[%s0 + $0x58] sm:$0xff]
  %v26 = vld [vmem:[%s0 + $0x60] sm:$0xff]
  %v27 = vld [vmem:[%s0 + $0x68] sm:$0xff]
  %v28 = vld [vmem:[%s0 + $0x70] sm:$0xff]
  %v29 = vld [vmem:[%s0 + $0x78] sm:$0xff]
  %v30 = vld [vmem:[%s0 + $0x80] sm:$0xff]
  %v31 = vld [vmem:[%s0 + $0x88] sm:$0xff]
  %v32 = vld [vmem:[%s0 + $0x90] sm:$0xff]
  %v33 = vld [vmem:[%s0 + $0x98] sm:$0xff]
  %v34 = vld [vmem:[%s0 + $0xa0] sm:$0xff]
  %v35 = vld [vmem:[%s0 + $0xa8] sm:$0xff]
  %v36 = vld [vmem:[%s0 + $0xb0] sm:$0xff]
  %v37 = vld [vmem:[%s0 + $0xb8] sm:$0xff]
  %v38 = vld [vmem:[%s0 + $0xc0] sm:$0xff]
  %v39 = vld [vmem:[%s0 + $0xc8] sm:$0xff]
  %v40 = vld [vmem:[%s0 + $0xd0] sm:$0xff]
  %v41 = vld [vmem:[%s0 + $0xd8] sm:$0xff]
  %v42 = vld [vmem:[%s0 + $0xe0] sm:$0xff]
  %v43 = vld [vmem:[%s0 + $0xe8] sm:$0xff]
  %v44 = vld [vmem:[%s0 + $0xf0] sm:$0xff]
  %v45 = vld [vmem:[%s0 + $0xf8] sm:$0xff]
  %v46 = vld [vmem:[%s0 + $0x100] sm:$0xff]
  %v47 = vld [vmem:[%s0 + $0x108] sm:$0xff]
  %v48 = vld [vmem:[%s0 + $0x110] sm:$0xff]
  %v49 = vld [vmem:[%s0 + $0x118] sm:$0xff]
  %v50 = vld [vmem:[%s0 + $0x120] sm:$0xff]
  %v51 = vld [vmem:[%s0 + $0x128] sm:$0xff]
  %v52 = vld [vmem:[%s0 + $0x130] sm:$0xff]
  %v53 = vld [vmem:[%s0 + $0x138] sm:$0xff]
  %v54 = vld [vmem:[%s0 + $0x140] sm:$0xff]
  %v55 = vld [vmem:[%s0 + $0x148] sm:$0xff]
  %v56 = vld [vmem:[%s0 + $0x150] sm:$0xff]
  %v57 = vld [vmem:[%s0 + $0x158] sm:$0xff]
  %v58 = vld [vmem:[%s0 + $0x160] sm:$0xff]
  %v59 = vld [vmem:[%s0 + $0x168] sm:$0xff]
  %v60 = vld [vmem:[%s0 + $0x170] sm:$0xff]
  %v61 = vld [vmem:[%s0 + $0x178] sm:$0xff]
  %v62 = vld [vmem:[%s0 + $0x180] sm:$0xff]
  %v63 = vld [vmem:[%s0 + $0x188] sm:$0xff]
  %v64 = vld [vmem:[%s0 + $0x190] sm:$0xff]
  %v65 = vld [vmem:[%s0 + $0x198] sm:$0xff]
  %v66 = vld [vmem:[%s0 + $0x1a0] sm:$0xff]
  %v67 = vld [vmem:[%s0 + $0x1a8] sm:$0xff]
  %v68 = vld [vmem:[%s0 + $0x1b0] sm:$0xff]
  %v69 = vld [vmem:[%s0 + $0x1b8] sm:$0xff]
  %v70 = vld [vmem:[%s0 + $0x1c0] sm:$0xff]
  %v71 = vld [vmem:[%s0 + $0x1c8] sm:$0xff]
  %v72 = vld [vmem:[%s0 + $0x1d0] sm:$0xff]
  %v73 = vld [vmem:[%s0 + $0x1d8] sm:$0xff]
  %v74 = vld [vmem:[%s0 + $0x1e0] sm:$0xff]
  %v75 = vld [vmem:[%s0 + $0x1e8] sm:$0xff]
  %v76 = vld [vmem:[%s0 + $0x1f0] sm:$0xff]
  %v77 = vld [vmem:[%s0 + $0x1f8] sm:$0xff]
  %v78 = vld [vmem:[%s0 + $0x200] sm:$0xff]
  %v79 = vld [vmem:[%s0 + $0x208] sm:$0xff]
  %v80 = vld [vmem:[%s0 + $0x210] sm:$0xff]
  %v81 = vld [vmem:[%s0 + $0x218] sm:$0xff]
  %v82 = vld [vmem:[%s0 + $0x220] sm:$0xff]
  %v83 = vld [vmem:[%s0 + $0x228] sm:$0xff]
  %v84 = vld [vmem:[%s0 + $0x230] sm:$0xff]
  %v85 = vld [vmem:[%s0 + $0x238] sm:$0xff]
  %v86 = vld [vmem:[%s0 + $0x240] sm:$0xff]
  %v87 = vld [vmem:[%s0 + $0x248] sm:$0xff]
  %v88 = vld [vmem:[%s0 + $0x250] sm:$0xff]
  %v89 = vld [vmem:[%s0 + $0x258] sm:$0xff]
  %v90 = vld [vmem:[%s0 + $0x260] sm:$0xff]
  %v91 = vld [vmem:[%s0 + $0x268] sm:$0xff]
  %v92 = vld [vmem:[%s0 + $0x270] sm:$0xff]
  %v93 = vld [vmem:[%s0 + $0x278] sm:$0xff]
  %v94 = vld [vmem:[%s0 + $0x280] sm:$0xff]
  %v95 = vld [vmem:[%s0 + $0x288] sm:$0xff]
  %v96 = vld [vmem:[%s0 + $0x290] sm:$0xff]
  %v97 = vld [vmem:[%s0 + $0x298] sm:$0xff]
  %v98 = vld [vmem:[%s0 + $0x2a0] sm:$0xff]
  %v99 = vld [vmem:[%s0 + $0x2a8] sm:$0xff]
  %v100 = vld [vmem:[%s0 + $0x2b0] sm:$0xff]
  %v101 = vld [vmem:[%s0 + $0x2b8] sm:$0xff]
  %v102 = vld [vmem:[%s0 + $0x2c0] sm:$0xff]
  %v103 = vld [vmem:[%s0 + $0x2c8] sm:$0xff]
  %v104 = vld [vmem:[%s0 + $0x2d0] sm:$0xff]
  %v105 = vld [vmem:[%s0 + $0x2d8] sm:$0xff]
  %v106 = vld [vmem:[%s0 + $0x2e0] sm:$0xff]
  %v107 = vld [vmem:[%s0 + $0x2e8] sm:$0xff]
  %v108 = vld [vmem:[%s0 + $0x2f0] sm:$0xff]
  %v109 = vld [vmem:[%s0 + $0x2f8] sm:$0xff]
  %vm110 = vcmask 556032
  %v111 = vsel %vm110, %v15, 0.0
  %v112 = vadd.f32 %v14, %v111
  %113 = vadd.xlane.f32.xlu0 %v112
  %v114 = vpop.xlane.xlu0 %113
  %v115 = vsel %vm110, %v17, 0.0
  %v116 = vadd.f32 %v16, %v115
  %117 = vadd.xlane.f32.xlu0 %v116
  %v118 = vpop.xlane.xlu0 %117
  %v119 = vsel %vm110, %v19, 0.0
  %v120 = vadd.f32 %v18, %v119
  %121 = vadd.xlane.f32.xlu0 %v120
  %v122 = vpop.xlane.xlu0 %121
  %v123 = vsel %vm110, %v21, 0.0
  %v124 = vadd.f32 %v20, %v123
  %125 = vadd.xlane.f32.xlu0 %v124
  %v126 = vpop.xlane.xlu0 %125
  %v127 = vsel %vm110, %v23, 0.0
  %v128 = vadd.f32 %v22, %v127
  %129 = vadd.xlane.f32.xlu0 %v128
  %v130 = vpop.xlane.xlu0 %129
  %v131 = vsel %vm110, %v25, 0.0
  %v132 = vadd.f32 %v24, %v131
  %133 = vadd.xlane.f32.xlu0 %v132
  %v134 = vpop.xlane.xlu0 %133
  %v135 = vsel %vm110, %v27, 0.0
  %v136 = vadd.f32 %v26, %v135
  %137 = vadd.xlane.f32.xlu0 %v136
  %v138 = vpop.xlane.xlu0 %137
  %v139 = vsel %vm110, %v29, 0.0
  %v140 = vadd.f32 %v28, %v139
  %141 = vadd.xlane.f32.xlu0 %v140
  %v142 = vpop.xlane.xlu0 %141
  %v143 = vsel %vm110, %v31, 0.0
  %v144 = vadd.f32 %v30, %v143
  %145 = vadd.xlane.f32.xlu0 %v144
  %v146 = vpop.xlane.xlu0 %145
  %v147 = vsel %vm110, %v33, 0.0
  %v148 = vadd.f32 %v32, %v147
  %149 = vadd.xlane.f32.xlu0 %v148
  %v150 = vpop.xlane.xlu0 %149
  %v151 = vsel %vm110, %v35, 0.0
  %v152 = vadd.f32 %v34, %v151
  %153 = vadd.xlane.f32.xlu0 %v152
  %v154 = vpop.xlane.xlu0 %153
  %v155 = vsel %vm110, %v37, 0.0
  %v156 = vadd.f32 %v36, %v155
  %157 = vadd.xlane.f32.xlu0 %v156
  %v158 = vpop.xlane.xlu0 %157
  %v159 = vsel %vm110, %v39, 0.0
  %v160 = vadd.f32 %v38, %v159
  %161 = vadd.xlane.f32.xlu0 %v160
  %v162 = vpop.xlane.xlu0 %161
  %v163 = vsel %vm110, %v41, 0.0
  %v164 = vadd.f32 %v40, %v163
  %165 = vadd.xlane.f32.xlu0 %v164
  %v166 = vpop.xlane.xlu0 %165
  %v167 = vsel %vm110, %v43, 0.0
  %v168 = vadd.f32 %v42, %v167
  %169 = vadd.xlane.f32.xlu0 %v168
  %v170 = vpop.xlane.xlu0 %169
  %v171 = vsel %vm110, %v45, 0.0
  %v172 = vadd.f32 %v44, %v171
  %173 = vadd.xlane.f32.xlu0 %v172
  %v174 = vpop.xlane.xlu0 %173
  %v175 = vsel %vm110, %v47, 0.0
  %v176 = vadd.f32 %v46, %v175
  %177 = vadd.xlane.f32.xlu0 %v176
  %v178 = vpop.xlane.xlu0 %177
  %v179 = vsel %vm110, %v49, 0.0
  %v180 = vadd.f32 %v48, %v179
  %181 = vadd.xlane.f32.xlu0 %v180
  %v182 = vpop.xlane.xlu0 %181
  %v183 = vsel %vm110, %v51, 0.0
  %v184 = vadd.f32 %v50, %v183
  %185 = vadd.xlane.f32.xlu0 %v184
  %v186 = vpop.xlane.xlu0 %185
  %v187 = vsel %vm110, %v53, 0.0
  %v188 = vadd.f32 %v52, %v187
  %189 = vadd.xlane.f32.xlu0 %v188
  %v190 = vpop.xlane.xlu0 %189
  %v191 = vsel %vm110, %v55, 0.0
  %v192 = vadd.f32 %v54, %v191
  %193 = vadd.xlane.f32.xlu0 %v192
  %v194 = vpop.xlane.xlu0 %193
  %v195 = vsel %vm110, %v57, 0.0
  %v196 = vadd.f32 %v56, %v195
  %197 = vadd.xlane.f32.xlu0 %v196
  %v198 = vpop.xlane.xlu0 %197
  %v199 = vsel %vm110, %v59, 0.0
  %v200 = vadd.f32 %v58, %v199
  %201 = vadd.xlane.f32.xlu0 %v200
  %v202 = vpop.xlane.xlu0 %201
  %v203 = vsel %vm110, %v61, 0.0
  %v204 = vadd.f32 %v60, %v203
  %205 = vadd.xlane.f32.xlu0 %v204
  %v206 = vpop.xlane.xlu0 %205
  %v207 = vsel %vm110, %v63, 0.0
  %v208 = vadd.f32 %v62, %v207
  %209 = vadd.xlane.f32.xlu0 %v208
  %v210 = vpop.xlane.xlu0 %209
  %v211 = vsel %vm110, %v65, 0.0
  %v212 = vadd.f32 %v64, %v211
  %213 = vadd.xlane.f32.xlu0 %v212
  %v214 = vpop.xlane.xlu0 %213
  %v215 = vsel %vm110, %v67, 0.0
  %v216 = vadd.f32 %v66, %v215
  %217 = vadd.xlane.f32.xlu0 %v216
  %v218 = vpop.xlane.xlu0 %217
  %v219 = vsel %vm110, %v69, 0.0
  %v220 = vadd.f32 %v68, %v219
  %221 = vadd.xlane.f32.xlu0 %v220
  %v222 = vpop.xlane.xlu0 %221
  %v223 = vsel %vm110, %v71, 0.0
  %v224 = vadd.f32 %v70, %v223
  %225 = vadd.xlane.f32.xlu0 %v224
  %v226 = vpop.xlane.xlu0 %225
  %v227 = vsel %vm110, %v73, 0.0
  %v228 = vadd.f32 %v72, %v227
  %229 = vadd.xlane.f32.xlu0 %v228
  %v230 = vpop.xlane.xlu0 %229
  %v231 = vsel %vm110, %v75, 0.0
  %v232 = vadd.f32 %v74, %v231
  %233 = vadd.xlane.f32.xlu0 %v232
  %v234 = vpop.xlane.xlu0 %233
  %v235 = vsel %vm110, %v77, 0.0
  %v236 = vadd.f32 %v76, %v235
  %237 = vadd.xlane.f32.xlu0 %v236
  %v238 = vpop.xlane.xlu0 %237
  %v239 = vsel %vm110, %v79, 0.0
  %v240 = vadd.f32 %v78, %v239
  %241 = vadd.xlane.f32.xlu0 %v240
  %v242 = vpop.xlane.xlu0 %241
  %v243 = vsel %vm110, %v81, 0.0
  %v244 = vadd.f32 %v80, %v243
  %245 = vadd.xlane.f32.xlu0 %v244
  %v246 = vpop.xlane.xlu0 %245
  %v247 = vsel %vm110, %v83, 0.0
  %v248 = vadd.f32 %v82, %v247
  %249 = vadd.xlane.f32.xlu0 %v248
  %v250 = vpop.xlane.xlu0 %249
  %v251 = vsel %vm110, %v85, 0.0
  %v252 = vadd.f32 %v84, %v251
  %253 = vadd.xlane.f32.xlu0 %v252
  %v254 = vpop.xlane.xlu0 %253
  %v255 = vsel %vm110, %v87, 0.0
  %v256 = vadd.f32 %v86, %v255
  %257 = vadd.xlane.f32.xlu0 %v256
  %v258 = vpop.xlane.xlu0 %257
  %v259 = vsel %vm110, %v89, 0.0
  %v260 = vadd.f32 %v88, %v259
  %261 = vadd.xlane.f32.xlu0 %v260
  %v262 = vpop.xlane.xlu0 %261
  %v263 = vsel %vm110, %v91, 0.0
  %v264 = vadd.f32 %v90, %v263
  %265 = vadd.xlane.f32.xlu0 %v264
  %v266 = vpop.xlane.xlu0 %265
  %v267 = vsel %vm110, %v93, 0.0
  %v268 = vadd.f32 %v92, %v267
  %269 = vadd.xlane.f32.xlu0 %v268
  %v270 = vpop.xlane.xlu0 %269
  %v271 = vsel %vm110, %v95, 0.0
  %v272 = vadd.f32 %v94, %v271
  %273 = vadd.xlane.f32.xlu0 %v272
  %v274 = vpop.xlane.xlu0 %273
  %v275 = vsel %vm110, %v97, 0.0
  %v276 = vadd.f32 %v96, %v275
  %277 = vadd.xlane.f32.xlu0 %v276
  %v278 = vpop.xlane.xlu0 %277
  %v279 = vsel %vm110, %v99, 0.0
  %v280 = vadd.f32 %v98, %v279
  %281 = vadd.xlane.f32.xlu0 %v280
  %v282 = vpop.xlane.xlu0 %281
  %v283 = vsel %vm110, %v101, 0.0
  %v284 = vadd.f32 %v100, %v283
  %285 = vadd.xlane.f32.xlu0 %v284
  %v286 = vpop.xlane.xlu0 %285
  %v287 = vsel %vm110, %v103, 0.0
  %v288 = vadd.f32 %v102, %v287
  %289 = vadd.xlane.f32.xlu0 %v288
  %v290 = vpop.xlane.xlu0 %289
  %v291 = vsel %vm110, %v105, 0.0
  %v292 = vadd.f32 %v104, %v291
  %293 = vadd.xlane.f32.xlu0 %v292
  %v294 = vpop.xlane.xlu0 %293
  %v295 = vsel %vm110, %v107, 0.0
  %v296 = vadd.f32 %v106, %v295
  %297 = vadd.xlane.f32.xlu0 %v296
  %v298 = vpop.xlane.xlu0 %297
  %v299 = vsel %vm110, %v109, 0.0
  %v300 = vadd.f32 %v108, %v299
  %301 = vadd.xlane.f32.xlu0 %v300
  %v302 = vpop.xlane.xlu0 %301
  %v303 = vmul.f32 %v14, %v14
  %v304 = vmul.f32 %v15, %v15
  %v305 = vmul.f32 %v16, %v16
  %v306 = vmul.f32 %v17, %v17
  %v307 = vmul.f32 %v18, %v18
  %v308 = vmul.f32 %v19, %v19
  %v309 = vmul.f32 %v20, %v20
  %v310 = vmul.f32 %v21, %v21
  %v311 = vmul.f32 %v22, %v22
  %v312 = vmul.f32 %v23, %v23
  %v313 = vmul.f32 %v24, %v24
  %v314 = vmul.f32 %v25, %v25
  %v315 = vmul.f32 %v26, %v26
  %v316 = vmul.f32 %v27, %v27
  %v317 = vmul.f32 %v28, %v28
  %v318 = vmul.f32 %v29, %v29
  %v319 = vmul.f32 %v30, %v30
  %v320 = vmul.f32 %v31, %v31
  %v321 = vmul.f32 %v32, %v32
  %v322 = vmul.f32 %v33, %v33
  %v323 = vmul.f32 %v34, %v34
  %v324 = vmul.f32 %v35, %v35
  %v325 = vmul.f32 %v36, %v36
  %v326 = vmul.f32 %v37, %v37
  %v327 = vmul.f32 %v38, %v38
  %v328 = vmul.f32 %v39, %v39
  %v329 = vmul.f32 %v40, %v40
  %v330 = vmul.f32 %v41, %v41
  %v331 = vmul.f32 %v42, %v42
  %v332 = vmul.f32 %v43, %v43
  %v333 = vmul.f32 %v44, %v44
  %v334 = vmul.f32 %v45, %v45
  %v335 = vmul.f32 %v46, %v46
  %v336 = vmul.f32 %v47, %v47
  %v337 = vmul.f32 %v48, %v48
  %v338 = vmul.f32 %v49, %v49
  %v339 = vmul.f32 %v50, %v50
  %v340 = vmul.f32 %v51, %v51
  %v341 = vmul.f32 %v52, %v52
  %v342 = vmul.f32 %v53, %v53
  %v343 = vmul.f32 %v54, %v54
  %v344 = vmul.f32 %v55, %v55
  %v345 = vmul.f32 %v56, %v56
  %v346 = vmul.f32 %v57, %v57
  %v347 = vmul.f32 %v58, %v58
  %v348 = vmul.f32 %v59, %v59
  %v349 = vmul.f32 %v60, %v60
  %v350 = vmul.f32 %v61, %v61
  %v351 = vmul.f32 %v62, %v62
  %v352 = vmul.f32 %v63, %v63
  %v353 = vmul.f32 %v64, %v64
  %v354 = vmul.f32 %v65, %v65
  %v355 = vmul.f32 %v66, %v66
  %v356 = vmul.f32 %v67, %v67
  %v357 = vmul.f32 %v68, %v68
  %v358 = vmul.f32 %v69, %v69
  %v359 = vmul.f32 %v70, %v70
  %v360 = vmul.f32 %v71, %v71
  %v361 = vmul.f32 %v72, %v72
  %v362 = vmul.f32 %v73, %v73
  %v363 = vmul.f32 %v74, %v74
  %v364 = vmul.f32 %v75, %v75
  %v365 = vmul.f32 %v76, %v76
  %v366 = vmul.f32 %v77, %v77
  %v367 = vmul.f32 %v78, %v78
  %v368 = vmul.f32 %v79, %v79
  %v369 = vmul.f32 %v80, %v80
  %v370 = vmul.f32 %v81, %v81
  %v371 = vmul.f32 %v82, %v82
  %v372 = vmul.f32 %v83, %v83
  %v373 = vmul.f32 %v84, %v84
  %v374 = vmul.f32 %v85, %v85
  %v375 = vmul.f32 %v86, %v86
  %v376 = vmul.f32 %v87, %v87
  %v377 = vmul.f32 %v88, %v88
  %v378 = vmul.f32 %v89, %v89
  %v379 = vmul.f32 %v90, %v90
  %v380 = vmul.f32 %v91, %v91
  %v381 = vmul.f32 %v92, %v92
  %v382 = vmul.f32 %v93, %v93
  %v383 = vmul.f32 %v94, %v94
  %v384 = vmul.f32 %v95, %v95
  %v385 = vmul.f32 %v96, %v96
  %v386 = vmul.f32 %v97, %v97
  %v387 = vmul.f32 %v98, %v98
  %v388 = vmul.f32 %v99, %v99
  %v389 = vmul.f32 %v100, %v100
  %v390 = vmul.f32 %v101, %v101
  %v391 = vmul.f32 %v102, %v102
  %v392 = vmul.f32 %v103, %v103
  %v393 = vmul.f32 %v104, %v104
  %v394 = vmul.f32 %v105, %v105
  %v395 = vmul.f32 %v106, %v106
  %v396 = vmul.f32 %v107, %v107
  %v397 = vmul.f32 %v108, %v108
  %v398 = vmul.f32 %v109, %v109
  %v399 = vsel %vm110, %v304, 0.0
  %v400 = vadd.f32 %v303, %v399
  %401 = vadd.xlane.f32.xlu0 %v400
  %v402 = vpop.xlane.xlu0 %401
  %v403 = vsel %vm110, %v306, 0.0
  %v404 = vadd.f32 %v305, %v403
  %405 = vadd.xlane.f32.xlu0 %v404
  %v406 = vpop.xlane.xlu0 %405
  %v407 = vsel %vm110, %v308, 0.0
  %v408 = vadd.f32 %v307, %v407
  %409 = vadd.xlane.f32.xlu0 %v408
  %v410 = vpop.xlane.xlu0 %409
  %v411 = vsel %vm110, %v310, 0.0
  %v412 = vadd.f32 %v309, %v411
  %413 = vadd.xlane.f32.xlu0 %v412
  %v414 = vpop.xlane.xlu0 %413
  %v415 = vsel %vm110, %v312, 0.0
  %v416 = vadd.f32 %v311, %v415
  %417 = vadd.xlane.f32.xlu0 %v416
  %v418 = vpop.xlane.xlu0 %417
  %v419 = vsel %vm110, %v314, 0.0
  %v420 = vadd.f32 %v313, %v419
  %421 = vadd.xlane.f32.xlu0 %v420
  %v422 = vpop.xlane.xlu0 %421
  %v423 = vsel %vm110, %v316, 0.0
  %v424 = vadd.f32 %v315, %v423
  %425 = vadd.xlane.f32.xlu0 %v424
  %v426 = vpop.xlane.xlu0 %425
  %v427 = vsel %vm110, %v318, 0.0
  %v428 = vadd.f32 %v317, %v427
  %429 = vadd.xlane.f32.xlu0 %v428
  %v430 = vpop.xlane.xlu0 %429
  %v431 = vsel %vm110, %v320, 0.0
  %v432 = vadd.f32 %v319, %v431
  %433 = vadd.xlane.f32.xlu0 %v432
  %v434 = vpop.xlane.xlu0 %433
  %v435 = vsel %vm110, %v322, 0.0
  %v436 = vadd.f32 %v321, %v435
  %437 = vadd.xlane.f32.xlu0 %v436
  %v438 = vpop.xlane.xlu0 %437
  %v439 = vsel %vm110, %v324, 0.0
  %v440 = vadd.f32 %v323, %v439
  %441 = vadd.xlane.f32.xlu0 %v440
  %v442 = vpop.xlane.xlu0 %441
  %v443 = vsel %vm110, %v326, 0.0
  %v444 = vadd.f32 %v325, %v443
  %445 = vadd.xlane.f32.xlu0 %v444
  %v446 = vpop.xlane.xlu0 %445
  %v447 = vsel %vm110, %v328, 0.0
  %v448 = vadd.f32 %v327, %v447
  %449 = vadd.xlane.f32.xlu0 %v448
  %v450 = vpop.xlane.xlu0 %449
  %v451 = vsel %vm110, %v330, 0.0
  %v452 = vadd.f32 %v329, %v451
  %453 = vadd.xlane.f32.xlu0 %v452
  %v454 = vpop.xlane.xlu0 %453
  %v455 = vsel %vm110, %v332, 0.0
  %v456 = vadd.f32 %v331, %v455
  %457 = vadd.xlane.f32.xlu0 %v456
  %v458 = vpop.xlane.xlu0 %457
  %v459 = vsel %vm110, %v334, 0.0
  %v460 = vadd.f32 %v333, %v459
  %461 = vadd.xlane.f32.xlu0 %v460
  %v462 = vpop.xlane.xlu0 %461
  %v463 = vsel %vm110, %v336, 0.0
  %v464 = vadd.f32 %v335, %v463
  %465 = vadd.xlane.f32.xlu0 %v464
  %v466 = vpop.xlane.xlu0 %465
  %v467 = vsel %vm110, %v338, 0.0
  %v468 = vadd.f32 %v337, %v467
  %469 = vadd.xlane.f32.xlu0 %v468
  %v470 = vpop.xlane.xlu0 %469
  %v471 = vsel %vm110, %v340, 0.0
  %v472 = vadd.f32 %v339, %v471
  %473 = vadd.xlane.f32.xlu0 %v472
  %v474 = vpop.xlane.xlu0 %473
  %v475 = vsel %vm110, %v342, 0.0
  %v476 = vadd.f32 %v341, %v475
  %477 = vadd.xlane.f32.xlu0 %v476
  %v478 = vpop.xlane.xlu0 %477
  %v479 = vsel %vm110, %v344, 0.0
  %v480 = vadd.f32 %v343, %v479
  %481 = vadd.xlane.f32.xlu0 %v480
  %v482 = vpop.xlane.xlu0 %481
  %v483 = vsel %vm110, %v346, 0.0
  %v484 = vadd.f32 %v345, %v483
  %485 = vadd.xlane.f32.xlu0 %v484
  %v486 = vpop.xlane.xlu0 %485
  %v487 = vsel %vm110, %v348, 0.0
  %v488 = vadd.f32 %v347, %v487
  %489 = vadd.xlane.f32.xlu0 %v488
  %v490 = vpop.xlane.xlu0 %489
  %v491 = vsel %vm110, %v350, 0.0
  %v492 = vadd.f32 %v349, %v491
  %493 = vadd.xlane.f32.xlu0 %v492
  %v494 = vpop.xlane.xlu0 %493
  %v495 = vsel %vm110, %v352, 0.0
  %v496 = vadd.f32 %v351, %v495
  %497 = vadd.xlane.f32.xlu0 %v496
  %v498 = vpop.xlane.xlu0 %497
  %v499 = vsel %vm110, %v354, 0.0
  %v500 = vadd.f32 %v353, %v499
  %501 = vadd.xlane.f32.xlu0 %v500
  %v502 = vpop.xlane.xlu0 %501
  %v503 = vsel %vm110, %v356, 0.0
  %v504 = vadd.f32 %v355, %v503
  %505 = vadd.xlane.f32.xlu0 %v504
  %v506 = vpop.xlane.xlu0 %505
  %v507 = vsel %vm110, %v358, 0.0
  %v508 = vadd.f32 %v357, %v507
  %509 = vadd.xlane.f32.xlu0 %v508
  %v510 = vpop.xlane.xlu0 %509
  %v511 = vsel %vm110, %v360, 0.0
  %v512 = vadd.f32 %v359, %v511
  %513 = vadd.xlane.f32.xlu0 %v512
  %v514 = vpop.xlane.xlu0 %513
  %v515 = vsel %vm110, %v362, 0.0
  %v516 = vadd.f32 %v361, %v515
  %517 = vadd.xlane.f32.xlu0 %v516
  %v518 = vpop.xlane.xlu0 %517
  %v519 = vsel %vm110, %v364, 0.0
  %v520 = vadd.f32 %v363, %v519
  %521 = vadd.xlane.f32.xlu0 %v520
  %v522 = vpop.xlane.xlu0 %521
  %v523 = vsel %vm110, %v366, 0.0
  %v524 = vadd.f32 %v365, %v523
  %525 = vadd.xlane.f32.xlu0 %v524
  %v526 = vpop.xlane.xlu0 %525
  %v527 = vsel %vm110, %v368, 0.0
  %v528 = vadd.f32 %v367, %v527
  %529 = vadd.xlane.f32.xlu0 %v528
  %v530 = vpop.xlane.xlu0 %529
  %v531 = vsel %vm110, %v370, 0.0
  %v532 = vadd.f32 %v369, %v531
  %533 = vadd.xlane.f32.xlu0 %v532
  %v534 = vpop.xlane.xlu0 %533
  %v535 = vsel %vm110, %v372, 0.0
  %v536 = vadd.f32 %v371, %v535
  %537 = vadd.xlane.f32.xlu0 %v536
  %v538 = vpop.xlane.xlu0 %537
  %v539 = vsel %vm110, %v374, 0.0
  %v540 = vadd.f32 %v373, %v539
  %541 = vadd.xlane.f32.xlu0 %v540
  %v542 = vpop.xlane.xlu0 %541
  %v543 = vsel %vm110, %v376, 0.0
  %v544 = vadd.f32 %v375, %v543
  %545 = vadd.xlane.f32.xlu0 %v544
  %v546 = vpop.xlane.xlu0 %545
  %v547 = vsel %vm110, %v378, 0.0
  %v548 = vadd.f32 %v377, %v547
  %549 = vadd.xlane.f32.xlu0 %v548
  %v550 = vpop.xlane.xlu0 %549
  %v551 = vsel %vm110, %v380, 0.0
  %v552 = vadd.f32 %v379, %v551
  %553 = vadd.xlane.f32.xlu0 %v552
  %v554 = vpop.xlane.xlu0 %553
  %v555 = vsel %vm110, %v382, 0.0
  %v556 = vadd.f32 %v381, %v555
  %557 = vadd.xlane.f32.xlu0 %v556
  %v558 = vpop.xlane.xlu0 %557
  %v559 = vsel %vm110, %v384, 0.0
  %v560 = vadd.f32 %v383, %v559
  %561 = vadd.xlane.f32.xlu0 %v560
  %v562 = vpop.xlane.xlu0 %561
  %v563 = vsel %vm110, %v386, 0.0
  %v564 = vadd.f32 %v385, %v563
  %565 = vadd.xlane.f32.xlu0 %v564
  %v566 = vpop.xlane.xlu0 %565
  %v567 = vsel %vm110, %v388, 0.0
  %v568 = vadd.f32 %v387, %v567
  %569 = vadd.xlane.f32.xlu0 %v568
  %v570 = vpop.xlane.xlu0 %569
  %v571 = vsel %vm110, %v390, 0.0
  %v572 = vadd.f32 %v389, %v571
  %573 = vadd.xlane.f32.xlu0 %v572
  %v574 = vpop.xlane.xlu0 %573
  %v575 = vsel %vm110, %v392, 0.0
  %v576 = vadd.f32 %v391, %v575
  %577 = vadd.xlane.f32.xlu0 %v576
  %v578 = vpop.xlane.xlu0 %577
  %v579 = vsel %vm110, %v394, 0.0
  %v580 = vadd.f32 %v393, %v579
  %581 = vadd.xlane.f32.xlu0 %v580
  %v582 = vpop.xlane.xlu0 %581
  %v583 = vsel %vm110, %v396, 0.0
  %v584 = vadd.f32 %v395, %v583
  %585 = vadd.xlane.f32.xlu0 %v584
  %v586 = vpop.xlane.xlu0 %585
  %v587 = vsel %vm110, %v398, 0.0
  %v588 = vadd.f32 %v397, %v587
  %589 = vadd.xlane.f32.xlu0 %v588
  %v590 = vpop.xlane.xlu0 %589
  %v591 = vmul.f32 %v114, 0.0051020407
  %v592 = vmul.f32 %v118, 0.0051020407
  %v593 = vmul.f32 %v122, 0.0051020407
  %v594 = vmul.f32 %v126, 0.0051020407
  %v595 = vmul.f32 %v130, 0.0051020407
  %v596 = vmul.f32 %v134, 0.0051020407
  %v597 = vmul.f32 %v138, 0.0051020407
  %v598 = vmul.f32 %v142, 0.0051020407
  %v599 = vmul.f32 %v146, 0.0051020407
  %v600 = vmul.f32 %v150, 0.0051020407
  %v601 = vmul.f32 %v154, 0.0051020407
  %v602 = vmul.f32 %v158, 0.0051020407
  %v603 = vmul.f32 %v162, 0.0051020407
  %v604 = vmul.f32 %v166, 0.0051020407
  %v605 = vmul.f32 %v170, 0.0051020407
  %v606 = vmul.f32 %v174, 0.0051020407
  %v607 = vmul.f32 %v178, 0.0051020407
  %v608 = vmul.f32 %v182, 0.0051020407
  %v609 = vmul.f32 %v186, 0.0051020407
  %v610 = vmul.f32 %v190, 0.0051020407
  %v611 = vmul.f32 %v194, 0.0051020407
  %v612 = vmul.f32 %v198, 0.0051020407
  %v613 = vmul.f32 %v202, 0.0051020407
  %v614 = vmul.f32 %v206, 0.0051020407
  %v615 = vmul.f32 %v210, 0.0051020407
  %v616 = vmul.f32 %v214, 0.0051020407
  %v617 = vmul.f32 %v218, 0.0051020407
  %v618 = vmul.f32 %v222, 0.0051020407
  %v619 = vmul.f32 %v226, 0.0051020407
  %v620 = vmul.f32 %v230, 0.0051020407
  %v621 = vmul.f32 %v234, 0.0051020407
  %v622 = vmul.f32 %v238, 0.0051020407
  %v623 = vmul.f32 %v242, 0.0051020407
  %v624 = vmul.f32 %v246, 0.0051020407
  %v625 = vmul.f32 %v250, 0.0051020407
  %v626 = vmul.f32 %v254, 0.0051020407
  %v627 = vmul.f32 %v258, 0.0051020407
  %v628 = vmul.f32 %v262, 0.0051020407
  %v629 = vmul.f32 %v266, 0.0051020407
  %v630 = vmul.f32 %v270, 0.0051020407
  %v631 = vmul.f32 %v274, 0.0051020407
  %v632 = vmul.f32 %v278, 0.0051020407
  %v633 = vmul.f32 %v282, 0.0051020407
  %v634 = vmul.f32 %v286, 0.0051020407
  %v635 = vmul.f32 %v290, 0.0051020407
  %v636 = vmul.f32 %v294, 0.0051020407
  %v637 = vmul.f32 %v298, 0.0051020407
  %v638 = vmul.f32 %v302, 0.0051020407
  %v639 = vmul.f32 %v402, 0.0051020407
  %v640 = vmul.f32 %v406, 0.0051020407
  %v641 = vmul.f32 %v410, 0.0051020407
  %v642 = vmul.f32 %v414, 0.0051020407
  %v643 = vmul.f32 %v418, 0.0051020407
  %v644 = vmul.f32 %v422, 0.0051020407
  %v645 = vmul.f32 %v426, 0.0051020407
  %v646 = vmul.f32 %v430, 0.0051020407
  %v647 = vmul.f32 %v434, 0.0051020407
  %v648 = vmul.f32 %v438, 0.0051020407
  %v649 = vmul.f32 %v442, 0.0051020407
  %v650 = vmul.f32 %v446, 0.0051020407
  %v651 = vmul.f32 %v450, 0.0051020407
  %v652 = vmul.f32 %v454, 0.0051020407
  %v653 = vmul.f32 %v458, 0.0051020407
  %v654 = vmul.f32 %v462, 0.0051020407
  %v655 = vmul.f32 %v466, 0.0051020407
  %v656 = vmul.f32 %v470, 0.0051020407
  %v657 = vmul.f32 %v474, 0.0051020407
  %v658 = vmul.f32 %v478, 0.0051020407
  %v659 = vmul.f32 %v482, 0.0051020407
  %v660 = vmul.f32 %v486, 0.0051020407
  %v661 = vmul.f32 %v490, 0.0051020407
  %v662 = vmul.f32 %v494, 0.0051020407
  %v663 = vmul.f32 %v498, 0.0051020407
  %v664 = vmul.f32 %v502, 0.0051020407
  %v665 = vmul.f32 %v506, 0.0051020407
  %v666 = vmul.f32 %v510, 0.0051020407
  %v667 = vmul.f32 %v514, 0.0051020407
  %v668 = vmul.f32 %v518, 0.0051020407
  %v669 = vmul.f32 %v522, 0.0051020407
  %v670 = vmul.f32 %v526, 0.0051020407
  %v671 = vmul.f32 %v530, 0.0051020407
  %v672 = vmul.f32 %v534, 0.0051020407
  %v673 = vmul.f32 %v538, 0.0051020407
  %v674 = vmul.f32 %v542, 0.0051020407
  %v675 = vmul.f32 %v546, 0.0051020407
  %v676 = vmul.f32 %v550, 0.0051020407
  %v677 = vmul.f32 %v554, 0.0051020407
  %v678 = vmul.f32 %v558, 0.0051020407
  %v679 = vmul.f32 %v562, 0.0051020407
  %v680 = vmul.f32 %v566, 0.0051020407
  %v681 = vmul.f32 %v570, 0.0051020407
  %v682 = vmul.f32 %v574, 0.0051020407
  %v683 = vmul.f32 %v578, 0.0051020407
  %v684 = vmul.f32 %v582, 0.0051020407
  %v685 = vmul.f32 %v586, 0.0051020407
  %v686 = vmul.f32 %v590, 0.0051020407
  %v687 = vmul.f32 %v591, %v591
  %v688 = vmul.f32 %v592, %v592
  %v689 = vmul.f32 %v593, %v593
  %v690 = vmul.f32 %v594, %v594
  %v691 = vmul.f32 %v595, %v595
  %v692 = vmul.f32 %v596, %v596
  %v693 = vmul.f32 %v597, %v597
  %v694 = vmul.f32 %v598, %v598
  %v695 = vmul.f32 %v599, %v599
  %v696 = vmul.f32 %v600, %v600
  %v697 = vmul.f32 %v601, %v601
  %v698 = vmul.f32 %v602, %v602
  %v699 = vmul.f32 %v603, %v603
  %v700 = vmul.f32 %v604, %v604
  %v701 = vmul.f32 %v605, %v605
  %v702 = vmul.f32 %v606, %v606
  %v703 = vmul.f32 %v607, %v607
  %v704 = vmul.f32 %v608, %v608
  %v705 = vmul.f32 %v609, %v609
  %v706 = vmul.f32 %v610, %v610
  %v707 = vmul.f32 %v611, %v611
  %v708 = vmul.f32 %v612, %v612
  %v709 = vmul.f32 %v613, %v613
  %v710 = vmul.f32 %v614, %v614
  %v711 = vmul.f32 %v615, %v615
  %v712 = vmul.f32 %v616, %v616
  %v713 = vmul.f32 %v617, %v617
  %v714 = vmul.f32 %v618, %v618
  %v715 = vmul.f32 %v619, %v619
  %v716 = vmul.f32 %v620, %v620
  %v717 = vmul.f32 %v621, %v621
  %v718 = vmul.f32 %v622, %v622
  %v719 = vmul.f32 %v623, %v623
  %v720 = vmul.f32 %v624, %v624
  %v721 = vmul.f32 %v625, %v625
  %v722 = vmul.f32 %v626, %v626
  %v723 = vmul.f32 %v627, %v627
  %v724 = vmul.f32 %v628, %v628
  %v725 = vmul.f32 %v629, %v629
  %v726 = vmul.f32 %v630, %v630
  %v727 = vmul.f32 %v631, %v631
  %v728 = vmul.f32 %v632, %v632
  %v729 = vmul.f32 %v633, %v633
  %v730 = vmul.f32 %v634, %v634
  %v731 = vmul.f32 %v635, %v635
  %v732 = vmul.f32 %v636, %v636
  %v733 = vmul.f32 %v637, %v637
  %v734 = vmul.f32 %v638, %v638
  %v735 = vsub.f32 %v639, %v687
  %v736 = vsub.f32 %v640, %v688
  %v737 = vsub.f32 %v641, %v689
  %v738 = vsub.f32 %v642, %v690
  %v739 = vsub.f32 %v643, %v691
  %v740 = vsub.f32 %v644, %v692
  %v741 = vsub.f32 %v645, %v693
  %v742 = vsub.f32 %v646, %v694
  %v743 = vsub.f32 %v647, %v695
  %v744 = vsub.f32 %v648, %v696
  %v745 = vsub.f32 %v649, %v697
  %v746 = vsub.f32 %v650, %v698
  %v747 = vsub.f32 %v651, %v699
  %v748 = vsub.f32 %v652, %v700
  %v749 = vsub.f32 %v653, %v701
  %v750 = vsub.f32 %v654, %v702
  %v751 = vsub.f32 %v655, %v703
  %v752 = vsub.f32 %v656, %v704
  %v753 = vsub.f32 %v657, %v705
  %v754 = vsub.f32 %v658, %v706
  %v755 = vsub.f32 %v659, %v707
  %v756 = vsub.f32 %v660, %v708
  %v757 = vsub.f32 %v661, %v709
  %v758 = vsub.f32 %v662, %v710
  %v759 = vsub.f32 %v663, %v711
  %v760 = vsub.f32 %v664, %v712
  %v761 = vsub.f32 %v665, %v713
  %v762 = vsub.f32 %v666, %v714
  %v763 = vsub.f32 %v667, %v715
  %v764 = vsub.f32 %v668, %v716
  %v765 = vsub.f32 %v669, %v717
  %v766 = vsub.f32 %v670, %v718
  %v767 = vsub.f32 %v671, %v719
  %v768 = vsub.f32 %v672, %v720
  %v769 = vsub.f32 %v673, %v721
  %v770 = vsub.f32 %v674, %v722
  %v771 = vsub.f32 %v675, %v723
  %v772 = vsub.f32 %v676, %v724
  %v773 = vsub.f32 %v677, %v725
  %v774 = vsub.f32 %v678, %v726
  %v775 = vsub.f32 %v679, %v727
  %v776 = vsub.f32 %v680, %v728
  %v777 = vsub.f32 %v681, %v729
  %v778 = vsub.f32 %v682, %v730
  %v779 = vsub.f32 %v683, %v731
  %v780 = vsub.f32 %v684, %v732
  %v781 = vsub.f32 %v685, %v733
  %v782 = vsub.f32 %v686, %v734
  %v783 = vmax.f32 %v735, 0.0
  %v784 = vmax.f32 %v736, 0.0
  %v785 = vmax.f32 %v737, 0.0
  %v786 = vmax.f32 %v738, 0.0
  %v787 = vmax.f32 %v739, 0.0
  %v788 = vmax.f32 %v740, 0.0
  %v789 = vmax.f32 %v741, 0.0
  %v790 = vmax.f32 %v742, 0.0
  %v791 = vmax.f32 %v743, 0.0
  %v792 = vmax.f32 %v744, 0.0
  %v793 = vmax.f32 %v745, 0.0
  %v794 = vmax.f32 %v746, 0.0
  %v795 = vmax.f32 %v747, 0.0
  %v796 = vmax.f32 %v748, 0.0
  %v797 = vmax.f32 %v749, 0.0
  %v798 = vmax.f32 %v750, 0.0
  %v799 = vmax.f32 %v751, 0.0
  %v800 = vmax.f32 %v752, 0.0
  %v801 = vmax.f32 %v753, 0.0
  %v802 = vmax.f32 %v754, 0.0
  %v803 = vmax.f32 %v755, 0.0
  %v804 = vmax.f32 %v756, 0.0
  %v805 = vmax.f32 %v757, 0.0
  %v806 = vmax.f32 %v758, 0.0
  %v807 = vmax.f32 %v759, 0.0
  %v808 = vmax.f32 %v760, 0.0
  %v809 = vmax.f32 %v761, 0.0
  %v810 = vmax.f32 %v762, 0.0
  %v811 = vmax.f32 %v763, 0.0
  %v812 = vmax.f32 %v764, 0.0
  %v813 = vmax.f32 %v765, 0.0
  %v814 = vmax.f32 %v766, 0.0
  %v815 = vmax.f32 %v767, 0.0
  %v816 = vmax.f32 %v768, 0.0
  %v817 = vmax.f32 %v769, 0.0
  %v818 = vmax.f32 %v770, 0.0
  %v819 = vmax.f32 %v771, 0.0
  %v820 = vmax.f32 %v772, 0.0
  %v821 = vmax.f32 %v773, 0.0
  %v822 = vmax.f32 %v774, 0.0
  %v823 = vmax.f32 %v775, 0.0
  %v824 = vmax.f32 %v776, 0.0
  %v825 = vmax.f32 %v777, 0.0
  %v826 = vmax.f32 %v778, 0.0
  %v827 = vmax.f32 %v779, 0.0
  %v828 = vmax.f32 %v780, 0.0
  %v829 = vmax.f32 %v781, 0.0
  %v830 = vmax.f32 %v782, 0.0
  %v831 = vadd.f32 %v783, 0.001
  %v832 = vadd.f32 %v784, 0.001
  %v833 = vadd.f32 %v785, 0.001
  %v834 = vadd.f32 %v786, 0.001
  %v835 = vadd.f32 %v787, 0.001
  %v836 = vadd.f32 %v788, 0.001
  %v837 = vadd.f32 %v789, 0.001
  %v838 = vadd.f32 %v790, 0.001
  %v839 = vadd.f32 %v791, 0.001
  %v840 = vadd.f32 %v792, 0.001
  %v841 = vadd.f32 %v793, 0.001
  %v842 = vadd.f32 %v794, 0.001
  %v843 = vadd.f32 %v795, 0.001
  %v844 = vadd.f32 %v796, 0.001
  %v845 = vadd.f32 %v797, 0.001
  %v846 = vadd.f32 %v798, 0.001
  %v847 = vadd.f32 %v799, 0.001
  %v848 = vadd.f32 %v800, 0.001
  %v849 = vadd.f32 %v801, 0.001
  %v850 = vadd.f32 %v802, 0.001
  %v851 = vadd.f32 %v803, 0.001
  %v852 = vadd.f32 %v804, 0.001
  %v853 = vadd.f32 %v805, 0.001
  %v854 = vadd.f32 %v806, 0.001
  %v855 = vadd.f32 %v807, 0.001
  %v856 = vadd.f32 %v808, 0.001
  %v857 = vadd.f32 %v809, 0.001
  %v858 = vadd.f32 %v810, 0.001
  %v859 = vadd.f32 %v811, 0.001
  %v860 = vadd.f32 %v812, 0.001
  %v861 = vadd.f32 %v813, 0.001
  %v862 = vadd.f32 %v814, 0.001
  %v863 = vadd.f32 %v815, 0.001
  %v864 = vadd.f32 %v816, 0.001
  %v865 = vadd.f32 %v817, 0.001
  %v866 = vadd.f32 %v818, 0.001
  %v867 = vadd.f32 %v819, 0.001
  %v868 = vadd.f32 %v820, 0.001
  %v869 = vadd.f32 %v821, 0.001
  %v870 = vadd.f32 %v822, 0.001
  %v871 = vadd.f32 %v823, 0.001
  %v872 = vadd.f32 %v824, 0.001
  %v873 = vadd.f32 %v825, 0.001
  %v874 = vadd.f32 %v826, 0.001
  %v875 = vadd.f32 %v827, 0.001
  %v876 = vadd.f32 %v828, 0.001
  %v877 = vadd.f32 %v829, 0.001
  %v878 = vadd.f32 %v830, 0.001
  %v879 = vrsqrt.pop %v831
  %v880 = vrsqrt.pop %v832
  %v881 = vrsqrt.pop %v833
  %v882 = vrsqrt.pop %v834
  %v883 = vrsqrt.pop %v835
  %v884 = vrsqrt.pop %v836
  %v885 = vrsqrt.pop %v837
  %v886 = vrsqrt.pop %v838
  %v887 = vrsqrt.pop %v839
  %v888 = vrsqrt.pop %v840
  %v889 = vrsqrt.pop %v841
  %v890 = vrsqrt.pop %v842
  %v891 = vrsqrt.pop %v843
  %v892 = vrsqrt.pop %v844
  %v893 = vrsqrt.pop %v845
  %v894 = vrsqrt.pop %v846
  %v895 = vrsqrt.pop %v847
  %v896 = vrsqrt.pop %v848
  %v897 = vrsqrt.pop %v849
  %v898 = vrsqrt.pop %v850
  %v899 = vrsqrt.pop %v851
  %v900 = vrsqrt.pop %v852
  %v901 = vrsqrt.pop %v853
  %v902 = vrsqrt.pop %v854
  %v903 = vrsqrt.pop %v855
  %v904 = vrsqrt.pop %v856
  %v905 = vrsqrt.pop %v857
  %v906 = vrsqrt.pop %v858
  %v907 = vrsqrt.pop %v859
  %v908 = vrsqrt.pop %v860
  %v909 = vrsqrt.pop %v861
  %v910 = vrsqrt.pop %v862
  %v911 = vrsqrt.pop %v863
  %v912 = vrsqrt.pop %v864
  %v913 = vrsqrt.pop %v865
  %v914 = vrsqrt.pop %v866
  %v915 = vrsqrt.pop %v867
  %v916 = vrsqrt.pop %v868
  %v917 = vrsqrt.pop %v869
  %v918 = vrsqrt.pop %v870
  %v919 = vrsqrt.pop %v871
  %v920 = vrsqrt.pop %v872
  %v921 = vrsqrt.pop %v873
  %v922 = vrsqrt.pop %v874
  %v923 = vrsqrt.pop %v875
  %v924 = vrsqrt.pop %v876
  %v925 = vrsqrt.pop %v877
  %v926 = vrsqrt.pop %v878
  %v927 = vld [vmem:[%s1] sm:$0xff]
  %v928 = vld [vmem:[%s1 + $0x8] sm:$0xff]
  %v929 = vld [vmem:[%s1 + $0x10] sm:$0xff]
  %v930 = vld [vmem:[%s1 + $0x18] sm:$0xff]
  %v931 = vld [vmem:[%s1 + $0x20] sm:$0xff]
  %v932 = vld [vmem:[%s1 + $0x28] sm:$0xff]
  %v933 = vld [vmem:[%s1 + $0x30] sm:$0xff]
  %v934 = vld [vmem:[%s1 + $0x38] sm:$0xff]
  %v935 = vld [vmem:[%s1 + $0x40] sm:$0xff]
  %v936 = vld [vmem:[%s1 + $0x48] sm:$0xff]
  %v937 = vld [vmem:[%s1 + $0x50] sm:$0xff]
  %v938 = vld [vmem:[%s1 + $0x58] sm:$0xff]
  %v939 = vld [vmem:[%s1 + $0x60] sm:$0xff]
  %v940 = vld [vmem:[%s1 + $0x68] sm:$0xff]
  %v941 = vld [vmem:[%s1 + $0x70] sm:$0xff]
  %v942 = vld [vmem:[%s1 + $0x78] sm:$0xff]
  %v943 = vld [vmem:[%s1 + $0x80] sm:$0xff]
  %v944 = vld [vmem:[%s1 + $0x88] sm:$0xff]
  %v945 = vld [vmem:[%s1 + $0x90] sm:$0xff]
  %v946 = vld [vmem:[%s1 + $0x98] sm:$0xff]
  %v947 = vld [vmem:[%s1 + $0xa0] sm:$0xff]
  %v948 = vld [vmem:[%s1 + $0xa8] sm:$0xff]
  %v949 = vld [vmem:[%s1 + $0xb0] sm:$0xff]
  %v950 = vld [vmem:[%s1 + $0xb8] sm:$0xff]
  %v951 = vld [vmem:[%s1 + $0xc0] sm:$0xff]
  %v952 = vld [vmem:[%s1 + $0xc8] sm:$0xff]
  %v953 = vld [vmem:[%s1 + $0xd0] sm:$0xff]
  %v954 = vld [vmem:[%s1 + $0xd8] sm:$0xff]
  %v955 = vld [vmem:[%s1 + $0xe0] sm:$0xff]
  %v956 = vld [vmem:[%s1 + $0xe8] sm:$0xff]
  %v957 = vld [vmem:[%s1 + $0xf0] sm:$0xff]
  %v958 = vld [vmem:[%s1 + $0xf8] sm:$0xff]
  %v959 = vld [vmem:[%s1 + $0x100] sm:$0xff]
  %v960 = vld [vmem:[%s1 + $0x108] sm:$0xff]
  %v961 = vld [vmem:[%s1 + $0x110] sm:$0xff]
  %v962 = vld [vmem:[%s1 + $0x118] sm:$0xff]
  %v963 = vld [vmem:[%s1 + $0x120] sm:$0xff]
  %v964 = vld [vmem:[%s1 + $0x128] sm:$0xff]
  %v965 = vld [vmem:[%s1 + $0x130] sm:$0xff]
  %v966 = vld [vmem:[%s1 + $0x138] sm:$0xff]
  %v967 = vld [vmem:[%s1 + $0x140] sm:$0xff]
  %v968 = vld [vmem:[%s1 + $0x148] sm:$0xff]
  %v969 = vld [vmem:[%s1 + $0x150] sm:$0xff]
  %v970 = vld [vmem:[%s1 + $0x158] sm:$0xff]
  %v971 = vld [vmem:[%s1 + $0x160] sm:$0xff]
  %v972 = vld [vmem:[%s1 + $0x168] sm:$0xff]
  %v973 = vld [vmem:[%s1 + $0x170] sm:$0xff]
  %v974 = vld [vmem:[%s1 + $0x178] sm:$0xff]
  %v975 = vmul.f32 %v927, %v879
  %v976 = vmul.f32 %v928, %v880
  %v977 = vmul.f32 %v929, %v881
  %v978 = vmul.f32 %v930, %v882
  %v979 = vmul.f32 %v931, %v883
  %v980 = vmul.f32 %v932, %v884
  %v981 = vmul.f32 %v933, %v885
  %v982 = vmul.f32 %v934, %v886
  %v983 = vmul.f32 %v935, %v887
  %v984 = vmul.f32 %v936, %v888
  %v985 = vmul.f32 %v937, %v889
  %v986 = vmul.f32 %v938, %v890
  %v987 = vmul.f32 %v939, %v891
  %v988 = vmul.f32 %v940, %v892
  %v989 = vmul.f32 %v941, %v893
  %v990 = vmul.f32 %v942, %v894
  %v991 = vmul.f32 %v943, %v895
  %v992 = vmul.f32 %v944, %v896
  %v993 = vmul.f32 %v945, %v897
  %v994 = vmul.f32 %v946, %v898
  %v995 = vmul.f32 %v947, %v899
  %v996 = vmul.f32 %v948, %v900
  %v997 = vmul.f32 %v949, %v901
  %v998 = vmul.f32 %v950, %v902
  %v999 = vmul.f32 %v951, %v903
  %v1000 = vmul.f32 %v952, %v904
  %v1001 = vmul.f32 %v953, %v905
  %v1002 = vmul.f32 %v954, %v906
  %v1003 = vmul.f32 %v955, %v907
  %v1004 = vmul.f32 %v956, %v908
  %v1005 = vmul.f32 %v957, %v909
  %v1006 = vmul.f32 %v958, %v910
  %v1007 = vmul.f32 %v959, %v911
  %v1008 = vmul.f32 %v960, %v912
  %v1009 = vmul.f32 %v961, %v913
  %v1010 = vmul.f32 %v962, %v914
  %v1011 = vmul.f32 %v963, %v915
  %v1012 = vmul.f32 %v964, %v916
  %v1013 = vmul.f32 %v965, %v917
  %v1014 = vmul.f32 %v966, %v918
  %v1015 = vmul.f32 %v967, %v919
  %v1016 = vmul.f32 %v968, %v920
  %v1017 = vmul.f32 %v969, %v921
  %v1018 = vmul.f32 %v970, %v922
  %v1019 = vmul.f32 %v971, %v923
  %v1020 = vmul.f32 %v972, %v924
  %v1021 = vmul.f32 %v973, %v925
  %v1022 = vmul.f32 %v974, %v926
  %v1023 = vld [vmem:[%s2] sm:$0xff]
  %v1024 = vld [vmem:[%s2 + $0x8] sm:$0xff]
  %v1025 = vld [vmem:[%s2 + $0x10] sm:$0xff]
  %v1026 = vld [vmem:[%s2 + $0x18] sm:$0xff]
  %v1027 = vld [vmem:[%s2 + $0x20] sm:$0xff]
  %v1028 = vld [vmem:[%s2 + $0x28] sm:$0xff]
  %v1029 = vld [vmem:[%s2 + $0x30] sm:$0xff]
  %v1030 = vld [vmem:[%s2 + $0x38] sm:$0xff]
  %v1031 = vld [vmem:[%s2 + $0x40] sm:$0xff]
  %v1032 = vld [vmem:[%s2 + $0x48] sm:$0xff]
  %v1033 = vld [vmem:[%s2 + $0x50] sm:$0xff]
  %v1034 = vld [vmem:[%s2 + $0x58] sm:$0xff]
  %v1035 = vld [vmem:[%s2 + $0x60] sm:$0xff]
  %v1036 = vld [vmem:[%s2 + $0x68] sm:$0xff]
  %v1037 = vld [vmem:[%s2 + $0x70] sm:$0xff]
  %v1038 = vld [vmem:[%s2 + $0x78] sm:$0xff]
  %v1039 = vld [vmem:[%s2 + $0x80] sm:$0xff]
  %v1040 = vld [vmem:[%s2 + $0x88] sm:$0xff]
  %v1041 = vld [vmem:[%s2 + $0x90] sm:$0xff]
  %v1042 = vld [vmem:[%s2 + $0x98] sm:$0xff]
  %v1043 = vld [vmem:[%s2 + $0xa0] sm:$0xff]
  %v1044 = vld [vmem:[%s2 + $0xa8] sm:$0xff]
  %v1045 = vld [vmem:[%s2 + $0xb0] sm:$0xff]
  %v1046 = vld [vmem:[%s2 + $0xb8] sm:$0xff]
  %v1047 = vld [vmem:[%s2 + $0xc0] sm:$0xff]
  %v1048 = vld [vmem:[%s2 + $0xc8] sm:$0xff]
  %v1049 = vld [vmem:[%s2 + $0xd0] sm:$0xff]
  %v1050 = vld [vmem:[%s2 + $0xd8] sm:$0xff]
  %v1051 = vld [vmem:[%s2 + $0xe0] sm:$0xff]
  %v1052 = vld [vmem:[%s2 + $0xe8] sm:$0xff]
  %v1053 = vld [vmem:[%s2 + $0xf0] sm:$0xff]
  %v1054 = vld [vmem:[%s2 + $0xf8] sm:$0xff]
  %v1055 = vld [vmem:[%s2 + $0x100] sm:$0xff]
  %v1056 = vld [vmem:[%s2 + $0x108] sm:$0xff]
  %v1057 = vld [vmem:[%s2 + $0x110] sm:$0xff]
  %v1058 = vld [vmem:[%s2 + $0x118] sm:$0xff]
  %v1059 = vld [vmem:[%s2 + $0x120] sm:$0xff]
  %v1060 = vld [vmem:[%s2 + $0x128] sm:$0xff]
  %v1061 = vld [vmem:[%s2 + $0x130] sm:$0xff]
  %v1062 = vld [vmem:[%s2 + $0x138] sm:$0xff]
  %v1063 = vld [vmem:[%s2 + $0x140] sm:$0xff]
  %v1064 = vld [vmem:[%s2 + $0x148] sm:$0xff]
  %v1065 = vld [vmem:[%s2 + $0x150] sm:$0xff]
  %v1066 = vld [vmem:[%s2 + $0x158] sm:$0xff]
  %v1067 = vld [vmem:[%s2 + $0x160] sm:$0xff]
  %v1068 = vld [vmem:[%s2 + $0x168] sm:$0xff]
  %v1069 = vld [vmem:[%s2 + $0x170] sm:$0xff]
  %v1070 = vld [vmem:[%s2 + $0x178] sm:$0xff]
  %v1071 = vmul.f32 %v591, %v975
  %v1072 = vmul.f32 %v592, %v976
  %v1073 = vmul.f32 %v593, %v977
  %v1074 = vmul.f32 %v594, %v978
  %v1075 = vmul.f32 %v595, %v979
  %v1076 = vmul.f32 %v596, %v980
  %v1077 = vmul.f32 %v597, %v981
  %v1078 = vmul.f32 %v598, %v982
  %v1079 = vmul.f32 %v599, %v983
  %v1080 = vmul.f32 %v600, %v984
  %v1081 = vmul.f32 %v601, %v985
  %v1082 = vmul.f32 %v602, %v986
  %v1083 = vmul.f32 %v603, %v987
  %v1084 = vmul.f32 %v604, %v988
  %v1085 = vmul.f32 %v605, %v989
  %v1086 = vmul.f32 %v606, %v990
  %v1087 = vmul.f32 %v607, %v991
  %v1088 = vmul.f32 %v608, %v992
  %v1089 = vmul.f32 %v609, %v993
  %v1090 = vmul.f32 %v610, %v994
  %v1091 = vmul.f32 %v611, %v995
  %v1092 = vmul.f32 %v612, %v996
  %v1093 = vmul.f32 %v613, %v997
  %v1094 = vmul.f32 %v614, %v998
  %v1095 = vmul.f32 %v615, %v999
  %v1096 = vmul.f32 %v616, %v1000
  %v1097 = vmul.f32 %v617, %v1001
  %v1098 = vmul.f32 %v618, %v1002
  %v1099 = vmul.f32 %v619, %v1003
  %v1100 = vmul.f32 %v620, %v1004
  %v1101 = vmul.f32 %v621, %v1005
  %v1102 = vmul.f32 %v622, %v1006
  %v1103 = vmul.f32 %v623, %v1007
  %v1104 = vmul.f32 %v624, %v1008
  %v1105 = vmul.f32 %v625, %v1009
  %v1106 = vmul.f32 %v626, %v1010
  %v1107 = vmul.f32 %v627, %v1011
  %v1108 = vmul.f32 %v628, %v1012
  %v1109 = vmul.f32 %v629, %v1013
  %v1110 = vmul.f32 %v630, %v1014
  %v1111 = vmul.f32 %v631, %v1015
  %v1112 = vmul.f32 %v632, %v1016
  %v1113 = vmul.f32 %v633, %v1017
  %v1114 = vmul.f32 %v634, %v1018
  %v1115 = vmul.f32 %v635, %v1019
  %v1116 = vmul.f32 %v636, %v1020
  %v1117 = vmul.f32 %v637, %v1021
  %v1118 = vmul.f32 %v638, %v1022
  %v1119 = vsub.f32 %v1023, %v1071
  %v1120 = vsub.f32 %v1024, %v1072
  %v1121 = vsub.f32 %v1025, %v1073
  %v1122 = vsub.f32 %v1026, %v1074
  %v1123 = vsub.f32 %v1027, %v1075
  %v1124 = vsub.f32 %v1028, %v1076
  %v1125 = vsub.f32 %v1029, %v1077
  %v1126 = vsub.f32 %v1030, %v1078
  %v1127 = vsub.f32 %v1031, %v1079
  %v1128 = vsub.f32 %v1032, %v1080
  %v1129 = vsub.f32 %v1033, %v1081
  %v1130 = vsub.f32 %v1034, %v1082
  %v1131 = vsub.f32 %v1035, %v1083
  %v1132 = vsub.f32 %v1036, %v1084
  %v1133 = vsub.f32 %v1037, %v1085
  %v1134 = vsub.f32 %v1038, %v1086
  %v1135 = vsub.f32 %v1039, %v1087
  %v1136 = vsub.f32 %v1040, %v1088
  %v1137 = vsub.f32 %v1041, %v1089
  %v1138 = vsub.f32 %v1042, %v1090
  %v1139 = vsub.f32 %v1043, %v1091
  %v1140 = vsub.f32 %v1044, %v1092
  %v1141 = vsub.f32 %v1045, %v1093
  %v1142 = vsub.f32 %v1046, %v1094
  %v1143 = vsub.f32 %v1047, %v1095
  %v1144 = vsub.f32 %v1048, %v1096
  %v1145 = vsub.f32 %v1049, %v1097
  %v1146 = vsub.f32 %v1050, %v1098
  %v1147 = vsub.f32 %v1051, %v1099
  %v1148 = vsub.f32 %v1052, %v1100
  %v1149 = vsub.f32 %v1053, %v1101
  %v1150 = vsub.f32 %v1054, %v1102
  %v1151 = vsub.f32 %v1055, %v1103
  %v1152 = vsub.f32 %v1056, %v1104
  %v1153 = vsub.f32 %v1057, %v1105
  %v1154 = vsub.f32 %v1058, %v1106
  %v1155 = vsub.f32 %v1059, %v1107
  %v1156 = vsub.f32 %v1060, %v1108
  %v1157 = vsub.f32 %v1061, %v1109
  %v1158 = vsub.f32 %v1062, %v1110
  %v1159 = vsub.f32 %v1063, %v1111
  %v1160 = vsub.f32 %v1064, %v1112
  %v1161 = vsub.f32 %v1065, %v1113
  %v1162 = vsub.f32 %v1066, %v1114
  %v1163 = vsub.f32 %v1067, %v1115
  %v1164 = vsub.f32 %v1068, %v1116
  %v1165 = vsub.f32 %v1069, %v1117
  %v1166 = vsub.f32 %v1070, %v1118
  %1168 = vset.pattern.permute.xlu0 0
  %1169 = vperm.xlu0 %1168, %v975
  %v1170 = vpop.permute.xlu0 %1169
  %1173 = vset.pattern.permute.xlu0 0
  %1174 = vperm.xlu0 %1173, %v976
  %v1175 = vpop.permute.xlu0 %1174
  %1178 = vset.pattern.permute.xlu0 0
  %1179 = vperm.xlu0 %1178, %v977
  %v1180 = vpop.permute.xlu0 %1179
  %1183 = vset.pattern.permute.xlu0 0
  %1184 = vperm.xlu0 %1183, %v978
  %v1185 = vpop.permute.xlu0 %1184
  %1188 = vset.pattern.permute.xlu0 0
  %1189 = vperm.xlu0 %1188, %v979
  %v1190 = vpop.permute.xlu0 %1189
  %1193 = vset.pattern.permute.xlu0 0
  %1194 = vperm.xlu0 %1193, %v980
  %v1195 = vpop.permute.xlu0 %1194
  %1198 = vset.pattern.permute.xlu0 0
  %1199 = vperm.xlu0 %1198, %v981
  %v1200 = vpop.permute.xlu0 %1199
  %1203 = vset.pattern.permute.xlu0 0
  %1204 = vperm.xlu0 %1203, %v982
  %v1205 = vpop.permute.xlu0 %1204
  %1208 = vset.pattern.permute.xlu0 0
  %1209 = vperm.xlu0 %1208, %v983
  %v1210 = vpop.permute.xlu0 %1209
  %1213 = vset.pattern.permute.xlu0 0
  %1214 = vperm.xlu0 %1213, %v984
  %v1215 = vpop.permute.xlu0 %1214
  %1218 = vset.pattern.permute.xlu0 0
  %1219 = vperm.xlu0 %1218, %v985
  %v1220 = vpop.permute.xlu0 %1219
  %1223 = vset.pattern.permute.xlu0 0
  %1224 = vperm.xlu0 %1223, %v986
  %v1225 = vpop.permute.xlu0 %1224
  %1228 = vset.pattern.permute.xlu0 0
  %1229 = vperm.xlu0 %1228, %v987
  %v1230 = vpop.permute.xlu0 %1229
  %1233 = vset.pattern.permute.xlu0 0
  %1234 = vperm.xlu0 %1233, %v988
  %v1235 = vpop.permute.xlu0 %1234
  %1238 = vset.pattern.permute.xlu0 0
  %1239 = vperm.xlu0 %1238, %v989
  %v1240 = vpop.permute.xlu0 %1239
  %1243 = vset.pattern.permute.xlu0 0
  %1244 = vperm.xlu0 %1243, %v990
  %v1245 = vpop.permute.xlu0 %1244
  %1248 = vset.pattern.permute.xlu0 0
  %1249 = vperm.xlu0 %1248, %v991
  %v1250 = vpop.permute.xlu0 %1249
  %1253 = vset.pattern.permute.xlu0 0
  %1254 = vperm.xlu0 %1253, %v992
  %v1255 = vpop.permute.xlu0 %1254
  %1258 = vset.pattern.permute.xlu0 0
  %1259 = vperm.xlu0 %1258, %v993
  %v1260 = vpop.permute.xlu0 %1259
  %1263 = vset.pattern.permute.xlu0 0
  %1264 = vperm.xlu0 %1263, %v994
  %v1265 = vpop.permute.xlu0 %1264
  %1268 = vset.pattern.permute.xlu0 0
  %1269 = vperm.xlu0 %1268, %v995
  %v1270 = vpop.permute.xlu0 %1269
  %1273 = vset.pattern.permute.xlu0 0
  %1274 = vperm.xlu0 %1273, %v996
  %v1275 = vpop.permute.xlu0 %1274
  %1278 = vset.pattern.permute.xlu0 0
  %1279 = vperm.xlu0 %1278, %v997
  %v1280 = vpop.permute.xlu0 %1279
  %1283 = vset.pattern.permute.xlu0 0
  %1284 = vperm.xlu0 %1283, %v998
  %v1285 = vpop.permute.xlu0 %1284
  %1288 = vset.pattern.permute.xlu0 0
  %1289 = vperm.xlu0 %1288, %v999
  %v1290 = vpop.permute.xlu0 %1289
  %1293 = vset.pattern.permute.xlu0 0
  %1294 = vperm.xlu0 %1293, %v1000
  %v1295 = vpop.permute.xlu0 %1294
  %1298 = vset.pattern.permute.xlu0 0
  %1299 = vperm.xlu0 %1298, %v1001
  %v1300 = vpop.permute.xlu0 %1299
  %1303 = vset.pattern.permute.xlu0 0
  %1304 = vperm.xlu0 %1303, %v1002
  %v1305 = vpop.permute.xlu0 %1304
  %1308 = vset.pattern.permute.xlu0 0
  %1309 = vperm.xlu0 %1308, %v1003
  %v1310 = vpop.permute.xlu0 %1309
  %1313 = vset.pattern.permute.xlu0 0
  %1314 = vperm.xlu0 %1313, %v1004
  %v1315 = vpop.permute.xlu0 %1314
  %1318 = vset.pattern.permute.xlu0 0
  %1319 = vperm.xlu0 %1318, %v1005
  %v1320 = vpop.permute.xlu0 %1319
  %1323 = vset.pattern.permute.xlu0 0
  %1324 = vperm.xlu0 %1323, %v1006
  %v1325 = vpop.permute.xlu0 %1324
  %1328 = vset.pattern.permute.xlu0 0
  %1329 = vperm.xlu0 %1328, %v1007
  %v1330 = vpop.permute.xlu0 %1329
  %1333 = vset.pattern.permute.xlu0 0
  %1334 = vperm.xlu0 %1333, %v1008
  %v1335 = vpop.permute.xlu0 %1334
  %1338 = vset.pattern.permute.xlu0 0
  %1339 = vperm.xlu0 %1338, %v1009
  %v1340 = vpop.permute.xlu0 %1339
  %1343 = vset.pattern.permute.xlu0 0
  %1344 = vperm.xlu0 %1343, %v1010
  %v1345 = vpop.permute.xlu0 %1344
  %1348 = vset.pattern.permute.xlu0 0
  %1349 = vperm.xlu0 %1348, %v1011
  %v1350 = vpop.permute.xlu0 %1349
  %1353 = vset.pattern.permute.xlu0 0
  %1354 = vperm.xlu0 %1353, %v1012
  %v1355 = vpop.permute.xlu0 %1354
  %1358 = vset.pattern.permute.xlu0 0
  %1359 = vperm.xlu0 %1358, %v1013
  %v1360 = vpop.permute.xlu0 %1359
  %1363 = vset.pattern.permute.xlu0 0
  %1364 = vperm.xlu0 %1363, %v1014
  %v1365 = vpop.permute.xlu0 %1364
  %1368 = vset.pattern.permute.xlu0 0
  %1369 = vperm.xlu0 %1368, %v1015
  %v1370 = vpop.permute.xlu0 %1369
  %1373 = vset.pattern.permute.xlu0 0
  %1374 = vperm.xlu0 %1373, %v1016
  %v1375 = vpop.permute.xlu0 %1374
  %1378 = vset.pattern.permute.xlu0 0
  %1379 = vperm.xlu0 %1378, %v1017
  %v1380 = vpop.permute.xlu0 %1379
  %1383 = vset.pattern.permute.xlu0 0
  %1384 = vperm.xlu0 %1383, %v1018
  %v1385 = vpop.permute.xlu0 %1384
  %1388 = vset.pattern.permute.xlu0 0
  %1389 = vperm.xlu0 %1388, %v1019
  %v1390 = vpop.permute.xlu0 %1389
  %1393 = vset.pattern.permute.xlu0 0
  %1394 = vperm.xlu0 %1393, %v1020
  %v1395 = vpop.permute.xlu0 %1394
  %1398 = vset.pattern.permute.xlu0 0
  %1399 = vperm.xlu0 %1398, %v1021
  %v1400 = vpop.permute.xlu0 %1399
  %1403 = vset.pattern.permute.xlu0 0
  %1404 = vperm.xlu0 %1403, %v1022
  %v1405 = vpop.permute.xlu0 %1404
  %v1407 = vmul.f32 %v14, %v1170
  %v1408 = vmul.f32 %v15, %v1170
  %v1409 = vmul.f32 %v16, %v1175
  %v1410 = vmul.f32 %v17, %v1175
  %v1411 = vmul.f32 %v18, %v1180
  %v1412 = vmul.f32 %v19, %v1180
  %v1413 = vmul.f32 %v20, %v1185
  %v1414 = vmul.f32 %v21, %v1185
  %v1415 = vmul.f32 %v22, %v1190
  %v1416 = vmul.f32 %v23, %v1190
  %v1417 = vmul.f32 %v24, %v1195
  %v1418 = vmul.f32 %v25, %v1195
  %v1419 = vmul.f32 %v26, %v1200
  %v1420 = vmul.f32 %v27, %v1200
  %v1421 = vmul.f32 %v28, %v1205
  %v1422 = vmul.f32 %v29, %v1205
  %v1423 = vmul.f32 %v30, %v1210
  %v1424 = vmul.f32 %v31, %v1210
  %v1425 = vmul.f32 %v32, %v1215
  %v1426 = vmul.f32 %v33, %v1215
  %v1427 = vmul.f32 %v34, %v1220
  %v1428 = vmul.f32 %v35, %v1220
  %v1429 = vmul.f32 %v36, %v1225
  %v1430 = vmul.f32 %v37, %v1225
  %v1431 = vmul.f32 %v38, %v1230
  %v1432 = vmul.f32 %v39, %v1230
  %v1433 = vmul.f32 %v40, %v1235
  %v1434 = vmul.f32 %v41, %v1235
  %v1435 = vmul.f32 %v42, %v1240
  %v1436 = vmul.f32 %v43, %v1240
  %v1437 = vmul.f32 %v44, %v1245
  %v1438 = vmul.f32 %v45, %v1245
  %v1439 = vmul.f32 %v46, %v1250
  %v1440 = vmul.f32 %v47, %v1250
  %v1441 = vmul.f32 %v48, %v1255
  %v1442 = vmul.f32 %v49, %v1255
  %v1443 = vmul.f32 %v50, %v1260
  %v1444 = vmul.f32 %v51, %v1260
  %v1445 = vmul.f32 %v52, %v1265
  %v1446 = vmul.f32 %v53, %v1265
  %v1447 = vmul.f32 %v54, %v1270
  %v1448 = vmul.f32 %v55, %v1270
  %v1449 = vmul.f32 %v56, %v1275
  %v1450 = vmul.f32 %v57, %v1275
  %v1451 = vmul.f32 %v58, %v1280
  %v1452 = vmul.f32 %v59, %v1280
  %v1453 = vmul.f32 %v60, %v1285
  %v1454 = vmul.f32 %v61, %v1285
  %v1455 = vmul.f32 %v62, %v1290
  %v1456 = vmul.f32 %v63, %v1290
  %v1457 = vmul.f32 %v64, %v1295
  %v1458 = vmul.f32 %v65, %v1295
  %v1459 = vmul.f32 %v66, %v1300
  %v1460 = vmul.f32 %v67, %v1300
  %v1461 = vmul.f32 %v68, %v1305
  %v1462 = vmul.f32 %v69, %v1305
  %v1463 = vmul.f32 %v70, %v1310
  %v1464 = vmul.f32 %v71, %v1310
  %v1465 = vmul.f32 %v72, %v1315
  %v1466 = vmul.f32 %v73, %v1315
  %v1467 = vmul.f32 %v74, %v1320
  %v1468 = vmul.f32 %v75, %v1320
  %v1469 = vmul.f32 %v76, %v1325
  %v1470 = vmul.f32 %v77, %v1325
  %v1471 = vmul.f32 %v78, %v1330
  %v1472 = vmul.f32 %v79, %v1330
  %v1473 = vmul.f32 %v80, %v1335
  %v1474 = vmul.f32 %v81, %v1335
  %v1475 = vmul.f32 %v82, %v1340
  %v1476 = vmul.f32 %v83, %v1340
  %v1477 = vmul.f32 %v84, %v1345
  %v1478 = vmul.f32 %v85, %v1345
  %v1479 = vmul.f32 %v86, %v1350
  %v1480 = vmul.f32 %v87, %v1350
  %v1481 = vmul.f32 %v88, %v1355
  %v1482 = vmul.f32 %v89, %v1355
  %v1483 = vmul.f32 %v90, %v1360
  %v1484 = vmul.f32 %v91, %v1360
  %v1485 = vmul.f32 %v92, %v1365
  %v1486 = vmul.f32 %v93, %v1365
  %v1487 = vmul.f32 %v94, %v1370
  %v1488 = vmul.f32 %v95, %v1370
  %v1489 = vmul.f32 %v96, %v1375
  %v1490 = vmul.f32 %v97, %v1375
  %v1491 = vmul.f32 %v98, %v1380
  %v1492 = vmul.f32 %v99, %v1380
  %v1493 = vmul.f32 %v100, %v1385
  %v1494 = vmul.f32 %v101, %v1385
  %v1495 = vmul.f32 %v102, %v1390
  %v1496 = vmul.f32 %v103, %v1390
  %v1497 = vmul.f32 %v104, %v1395
  %v1498 = vmul.f32 %v105, %v1395
  %v1499 = vmul.f32 %v106, %v1400
  %v1500 = vmul.f32 %v107, %v1400
  %v1501 = vmul.f32 %v108, %v1405
  %v1502 = vmul.f32 %v109, %v1405
  %1504 = vset.pattern.permute.xlu0 0
  %1505 = vperm.xlu0 %1504, %v1119
  %v1506 = vpop.permute.xlu0 %1505
  %1509 = vset.pattern.permute.xlu0 0
  %1510 = vperm.xlu0 %1509, %v1120
  %v1511 = vpop.permute.xlu0 %1510
  %1514 = vset.pattern.permute.xlu0 0
  %1515 = vperm.xlu0 %1514, %v1121
  %v1516 = vpop.permute.xlu0 %1515
  %1519 = vset.pattern.permute.xlu0 0
  %1520 = vperm.xlu0 %1519, %v1122
  %v1521 = vpop.permute.xlu0 %1520
  %1524 = vset.pattern.permute.xlu0 0
  %1525 = vperm.xlu0 %1524, %v1123
  %v1526 = vpop.permute.xlu0 %1525
  %1529 = vset.pattern.permute.xlu0 0
  %1530 = vperm.xlu0 %1529, %v1124
  %v1531 = vpop.permute.xlu0 %1530
  %1534 = vset.pattern.permute.xlu0 0
  %1535 = vperm.xlu0 %1534, %v1125
  %v1536 = vpop.permute.xlu0 %1535
  %1539 = vset.pattern.permute.xlu0 0
  %1540 = vperm.xlu0 %1539, %v1126
  %v1541 = vpop.permute.xlu0 %1540
  %1544 = vset.pattern.permute.xlu0 0
  %1545 = vperm.xlu0 %1544, %v1127
  %v1546 = vpop.permute.xlu0 %1545
  %1549 = vset.pattern.permute.xlu0 0
  %1550 = vperm.xlu0 %1549, %v1128
  %v1551 = vpop.permute.xlu0 %1550
  %1554 = vset.pattern.permute.xlu0 0
  %1555 = vperm.xlu0 %1554, %v1129
  %v1556 = vpop.permute.xlu0 %1555
  %1559 = vset.pattern.permute.xlu0 0
  %1560 = vperm.xlu0 %1559, %v1130
  %v1561 = vpop.permute.xlu0 %1560
  %1564 = vset.pattern.permute.xlu0 0
  %1565 = vperm.xlu0 %1564, %v1131
  %v1566 = vpop.permute.xlu0 %1565
  %1569 = vset.pattern.permute.xlu0 0
  %1570 = vperm.xlu0 %1569, %v1132
  %v1571 = vpop.permute.xlu0 %1570
  %1574 = vset.pattern.permute.xlu0 0
  %1575 = vperm.xlu0 %1574, %v1133
  %v1576 = vpop.permute.xlu0 %1575
  %1579 = vset.pattern.permute.xlu0 0
  %1580 = vperm.xlu0 %1579, %v1134
  %v1581 = vpop.permute.xlu0 %1580
  %1584 = vset.pattern.permute.xlu0 0
  %1585 = vperm.xlu0 %1584, %v1135
  %v1586 = vpop.permute.xlu0 %1585
  %1589 = vset.pattern.permute.xlu0 0
  %1590 = vperm.xlu0 %1589, %v1136
  %v1591 = vpop.permute.xlu0 %1590
  %1594 = vset.pattern.permute.xlu0 0
  %1595 = vperm.xlu0 %1594, %v1137
  %v1596 = vpop.permute.xlu0 %1595
  %1599 = vset.pattern.permute.xlu0 0
  %1600 = vperm.xlu0 %1599, %v1138
  %v1601 = vpop.permute.xlu0 %1600
  %1604 = vset.pattern.permute.xlu0 0
  %1605 = vperm.xlu0 %1604, %v1139
  %v1606 = vpop.permute.xlu0 %1605
  %1609 = vset.pattern.permute.xlu0 0
  %1610 = vperm.xlu0 %1609, %v1140
  %v1611 = vpop.permute.xlu0 %1610
  %1614 = vset.pattern.permute.xlu0 0
  %1615 = vperm.xlu0 %1614, %v1141
  %v1616 = vpop.permute.xlu0 %1615
  %1619 = vset.pattern.permute.xlu0 0
  %1620 = vperm.xlu0 %1619, %v1142
  %v1621 = vpop.permute.xlu0 %1620
  %1624 = vset.pattern.permute.xlu0 0
  %1625 = vperm.xlu0 %1624, %v1143
  %v1626 = vpop.permute.xlu0 %1625
  %1629 = vset.pattern.permute.xlu0 0
  %1630 = vperm.xlu0 %1629, %v1144
  %v1631 = vpop.permute.xlu0 %1630
  %1634 = vset.pattern.permute.xlu0 0
  %1635 = vperm.xlu0 %1634, %v1145
  %v1636 = vpop.permute.xlu0 %1635
  %1639 = vset.pattern.permute.xlu0 0
  %1640 = vperm.xlu0 %1639, %v1146
  %v1641 = vpop.permute.xlu0 %1640
  %1644 = vset.pattern.permute.xlu0 0
  %1645 = vperm.xlu0 %1644, %v1147
  %v1646 = vpop.permute.xlu0 %1645
  %1649 = vset.pattern.permute.xlu0 0
  %1650 = vperm.xlu0 %1649, %v1148
  %v1651 = vpop.permute.xlu0 %1650
  %1654 = vset.pattern.permute.xlu0 0
  %1655 = vperm.xlu0 %1654, %v1149
  %v1656 = vpop.permute.xlu0 %1655
  %1659 = vset.pattern.permute.xlu0 0
  %1660 = vperm.xlu0 %1659, %v1150
  %v1661 = vpop.permute.xlu0 %1660
  %1664 = vset.pattern.permute.xlu0 0
  %1665 = vperm.xlu0 %1664, %v1151
  %v1666 = vpop.permute.xlu0 %1665
  %1669 = vset.pattern.permute.xlu0 0
  %1670 = vperm.xlu0 %1669, %v1152
  %v1671 = vpop.permute.xlu0 %1670
  %1674 = vset.pattern.permute.xlu0 0
  %1675 = vperm.xlu0 %1674, %v1153
  %v1676 = vpop.permute.xlu0 %1675
  %1679 = vset.pattern.permute.xlu0 0
  %1680 = vperm.xlu0 %1679, %v1154
  %v1681 = vpop.permute.xlu0 %1680
  %1684 = vset.pattern.permute.xlu0 0
  %1685 = vperm.xlu0 %1684, %v1155
  %v1686 = vpop.permute.xlu0 %1685
  %1689 = vset.pattern.permute.xlu0 0
  %1690 = vperm.xlu0 %1689, %v1156
  %v1691 = vpop.permute.xlu0 %1690
  %1694 = vset.pattern.permute.xlu0 0
  %1695 = vperm.xlu0 %1694, %v1157
  %v1696 = vpop.permute.xlu0 %1695
  %1699 = vset.pattern.permute.xlu0 0
  %1700 = vperm.xlu0 %1699, %v1158
  %v1701 = vpop.permute.xlu0 %1700
  %1704 = vset.pattern.permute.xlu0 0
  %1705 = vperm.xlu0 %1704, %v1159
  %v1706 = vpop.permute.xlu0 %1705
  %1709 = vset.pattern.permute.xlu0 0
  %1710 = vperm.xlu0 %1709, %v1160
  %v1711 = vpop.permute.xlu0 %1710
  %1714 = vset.pattern.permute.xlu0 0
  %1715 = vperm.xlu0 %1714, %v1161
  %v1716 = vpop.permute.xlu0 %1715
  %1719 = vset.pattern.permute.xlu0 0
  %1720 = vperm.xlu0 %1719, %v1162
  %v1721 = vpop.permute.xlu0 %1720
  %1724 = vset.pattern.permute.xlu0 0
  %1725 = vperm.xlu0 %1724, %v1163
  %v1726 = vpop.permute.xlu0 %1725
  %1729 = vset.pattern.permute.xlu0 0
  %1730 = vperm.xlu0 %1729, %v1164
  %v1731 = vpop.permute.xlu0 %1730
  %1734 = vset.pattern.permute.xlu0 0
  %1735 = vperm.xlu0 %1734, %v1165
  %v1736 = vpop.permute.xlu0 %1735
  %1739 = vset.pattern.permute.xlu0 0
  %1740 = vperm.xlu0 %1739, %v1166
  %v1741 = vpop.permute.xlu0 %1740
  %v1743 = vadd.f32 %v1407, %v1506
  %v1744 = vadd.f32 %v1408, %v1506
  %v1745 = vadd.f32 %v1409, %v1511
  %v1746 = vadd.f32 %v1410, %v1511
  %v1747 = vadd.f32 %v1411, %v1516
  %v1748 = vadd.f32 %v1412, %v1516
  %v1749 = vadd.f32 %v1413, %v1521
  %v1750 = vadd.f32 %v1414, %v1521
  %v1751 = vadd.f32 %v1415, %v1526
  %v1752 = vadd.f32 %v1416, %v1526
  %v1753 = vadd.f32 %v1417, %v1531
  %v1754 = vadd.f32 %v1418, %v1531
  %v1755 = vadd.f32 %v1419, %v1536
  %v1756 = vadd.f32 %v1420, %v1536
  %v1757 = vadd.f32 %v1421, %v1541
  %v1758 = vadd.f32 %v1422, %v1541
  %v1759 = vadd.f32 %v1423, %v1546
  %v1760 = vadd.f32 %v1424, %v1546
  %v1761 = vadd.f32 %v1425, %v1551
  %v1762 = vadd.f32 %v1426, %v1551
  %v1763 = vadd.f32 %v1427, %v1556
  %v1764 = vadd.f32 %v1428, %v1556
  %v1765 = vadd.f32 %v1429, %v1561
  %v1766 = vadd.f32 %v1430, %v1561
  %v1767 = vadd.f32 %v1431, %v1566
  %v1768 = vadd.f32 %v1432, %v1566
  %v1769 = vadd.f32 %v1433, %v1571
  %v1770 = vadd.f32 %v1434, %v1571
  %v1771 = vadd.f32 %v1435, %v1576
  %v1772 = vadd.f32 %v1436, %v1576
  %v1773 = vadd.f32 %v1437, %v1581
  %v1774 = vadd.f32 %v1438, %v1581
  %v1775 = vadd.f32 %v1439, %v1586
  %v1776 = vadd.f32 %v1440, %v1586
  %v1777 = vadd.f32 %v1441, %v1591
  %v1778 = vadd.f32 %v1442, %v1591
  %v1779 = vadd.f32 %v1443, %v1596
  %v1780 = vadd.f32 %v1444, %v1596
  %v1781 = vadd.f32 %v1445, %v1601
  %v1782 = vadd.f32 %v1446, %v1601
  %v1783 = vadd.f32 %v1447, %v1606
  %v1784 = vadd.f32 %v1448, %v1606
  %v1785 = vadd.f32 %v1449, %v1611
  %v1786 = vadd.f32 %v1450, %v1611
  %v1787 = vadd.f32 %v1451, %v1616
  %v1788 = vadd.f32 %v1452, %v1616
  %v1789 = vadd.f32 %v1453, %v1621
  %v1790 = vadd.f32 %v1454, %v1621
  %v1791 = vadd.f32 %v1455, %v1626
  %v1792 = vadd.f32 %v1456, %v1626
  %v1793 = vadd.f32 %v1457, %v1631
  %v1794 = vadd.f32 %v1458, %v1631
  %v1795 = vadd.f32 %v1459, %v1636
  %v1796 = vadd.f32 %v1460, %v1636
  %v1797 = vadd.f32 %v1461, %v1641
  %v1798 = vadd.f32 %v1462, %v1641
  %v1799 = vadd.f32 %v1463, %v1646
  %v1800 = vadd.f32 %v1464, %v1646
  %v1801 = vadd.f32 %v1465, %v1651
  %v1802 = vadd.f32 %v1466, %v1651
  %v1803 = vadd.f32 %v1467, %v1656
  %v1804 = vadd.f32 %v1468, %v1656
  %v1805 = vadd.f32 %v1469, %v1661
  %v1806 = vadd.f32 %v1470, %v1661
  %v1807 = vadd.f32 %v1471, %v1666
  %v1808 = vadd.f32 %v1472, %v1666
  %v1809 = vadd.f32 %v1473, %v1671
  %v1810 = vadd.f32 %v1474, %v1671
  %v1811 = vadd.f32 %v1475, %v1676
  %v1812 = vadd.f32 %v1476, %v1676
  %v1813 = vadd.f32 %v1477, %v1681
  %v1814 = vadd.f32 %v1478, %v1681
  %v1815 = vadd.f32 %v1479, %v1686
  %v1816 = vadd.f32 %v1480, %v1686
  %v1817 = vadd.f32 %v1481, %v1691
  %v1818 = vadd.f32 %v1482, %v1691
  %v1819 = vadd.f32 %v1483, %v1696
  %v1820 = vadd.f32 %v1484, %v1696
  %v1821 = vadd.f32 %v1485, %v1701
  %v1822 = vadd.f32 %v1486, %v1701
  %v1823 = vadd.f32 %v1487, %v1706
  %v1824 = vadd.f32 %v1488, %v1706
  %v1825 = vadd.f32 %v1489, %v1711
  %v1826 = vadd.f32 %v1490, %v1711
  %v1827 = vadd.f32 %v1491, %v1716
  %v1828 = vadd.f32 %v1492, %v1716
  %v1829 = vadd.f32 %v1493, %v1721
  %v1830 = vadd.f32 %v1494, %v1721
  %v1831 = vadd.f32 %v1495, %v1726
  %v1832 = vadd.f32 %v1496, %v1726
  %v1833 = vadd.f32 %v1497, %v1731
  %v1834 = vadd.f32 %v1498, %v1731
  %v1835 = vadd.f32 %v1499, %v1736
  %v1836 = vadd.f32 %v1500, %v1736
  %v1837 = vadd.f32 %v1501, %v1741
  %v1838 = vadd.f32 %v1502, %v1741
  %1839 = vst [vmem:[%s3] sm:$0xff] %v1743
  %1840 = vst.msk [vmem:[%s3 + $0x8] sm:$0xff] %vm110, %v1744
  %1841 = vst [vmem:[%s3 + $0x10] sm:$0xff] %v1745
  %1842 = vst.msk [vmem:[%s3 + $0x18] sm:$0xff] %vm110, %v1746
  %1843 = vst [vmem:[%s3 + $0x20] sm:$0xff] %v1747
  %1844 = vst.msk [vmem:[%s3 + $0x28] sm:$0xff] %vm110, %v1748
  %1845 = vst [vmem:[%s3 + $0x30] sm:$0xff] %v1749
  %1846 = vst.msk [vmem:[%s3 + $0x38] sm:$0xff] %vm110, %v1750
  %1847 = vst [vmem:[%s3 + $0x40] sm:$0xff] %v1751
  %1848 = vst.msk [vmem:[%s3 + $0x48] sm:$0xff] %vm110, %v1752
  %1849 = vst [vmem:[%s3 + $0x50] sm:$0xff] %v1753
  %1850 = vst.msk [vmem:[%s3 + $0x58] sm:$0xff] %vm110, %v1754
  %1851 = vst [vmem:[%s3 + $0x60] sm:$0xff] %v1755
  %1852 = vst.msk [vmem:[%s3 + $0x68] sm:$0xff] %vm110, %v1756
  %1853 = vst [vmem:[%s3 + $0x70] sm:$0xff] %v1757
  %1854 = vst.msk [vmem:[%s3 + $0x78] sm:$0xff] %vm110, %v1758
  %1855 = vst [vmem:[%s3 + $0x80] sm:$0xff] %v1759
  %1856 = vst.msk [vmem:[%s3 + $0x88] sm:$0xff] %vm110, %v1760
  %1857 = vst [vmem:[%s3 + $0x90] sm:$0xff] %v1761
  %1858 = vst.msk [vmem:[%s3 + $0x98] sm:$0xff] %vm110, %v1762
  %1859 = vst [vmem:[%s3 + $0xa0] sm:$0xff] %v1763
  %1860 = vst.msk [vmem:[%s3 + $0xa8] sm:$0xff] %vm110, %v1764
  %1861 = vst [vmem:[%s3 + $0xb0] sm:$0xff] %v1765
  %1862 = vst.msk [vmem:[%s3 + $0xb8] sm:$0xff] %vm110, %v1766
  %1863 = vst [vmem:[%s3 + $0xc0] sm:$0xff] %v1767
  %1864 = vst.msk [vmem:[%s3 + $0xc8] sm:$0xff] %vm110, %v1768
  %1865 = vst [vmem:[%s3 + $0xd0] sm:$0xff] %v1769
  %1866 = vst.msk [vmem:[%s3 + $0xd8] sm:$0xff] %vm110, %v1770
  %1867 = vst [vmem:[%s3 + $0xe0] sm:$0xff] %v1771
  %1868 = vst.msk [vmem:[%s3 + $0xe8] sm:$0xff] %vm110, %v1772
  %1869 = vst [vmem:[%s3 + $0xf0] sm:$0xff] %v1773
  %1870 = vst.msk [vmem:[%s3 + $0xf8] sm:$0xff] %vm110, %v1774
  %1871 = vst [vmem:[%s3 + $0x100] sm:$0xff] %v1775
  %1872 = vst.msk [vmem:[%s3 + $0x108] sm:$0xff] %vm110, %v1776
  %1873 = vst [vmem:[%s3 + $0x110] sm:$0xff] %v1777
  %1874 = vst.msk [vmem:[%s3 + $0x118] sm:$0xff] %vm110, %v1778
  %1875 = vst [vmem:[%s3 + $0x120] sm:$0xff] %v1779
  %1876 = vst.msk [vmem:[%s3 + $0x128] sm:$0xff] %vm110, %v1780
  %1877 = vst [vmem:[%s3 + $0x130] sm:$0xff] %v1781
  %1878 = vst.msk [vmem:[%s3 + $0x138] sm:$0xff] %vm110, %v1782
  %1879 = vst [vmem:[%s3 + $0x140] sm:$0xff] %v1783
  %1880 = vst.msk [vmem:[%s3 + $0x148] sm:$0xff] %vm110, %v1784
  %1881 = vst [vmem:[%s3 + $0x150] sm:$0xff] %v1785
  %1882 = vst.msk [vmem:[%s3 + $0x158] sm:$0xff] %vm110, %v1786
  %1883 = vst [vmem:[%s3 + $0x160] sm:$0xff] %v1787
  %1884 = vst.msk [vmem:[%s3 + $0x168] sm:$0xff] %vm110, %v1788
  %1885 = vst [vmem:[%s3 + $0x170] sm:$0xff] %v1789
  %1886 = vst.msk [vmem:[%s3 + $0x178] sm:$0xff] %vm110, %v1790
  %1887 = vst [vmem:[%s3 + $0x180] sm:$0xff] %v1791
  %1888 = vst.msk [vmem:[%s3 + $0x188] sm:$0xff] %vm110, %v1792
  %1889 = vst [vmem:[%s3 + $0x190] sm:$0xff] %v1793
  %1890 = vst.msk [vmem:[%s3 + $0x198] sm:$0xff] %vm110, %v1794
  %1891 = vst [vmem:[%s3 + $0x1a0] sm:$0xff] %v1795
  %1892 = vst.msk [vmem:[%s3 + $0x1a8] sm:$0xff] %vm110, %v1796
  %1893 = vst [vmem:[%s3 + $0x1b0] sm:$0xff] %v1797
  %1894 = vst.msk [vmem:[%s3 + $0x1b8] sm:$0xff] %vm110, %v1798
  %1895 = vst [vmem:[%s3 + $0x1c0] sm:$0xff] %v1799
  %1896 = vst.msk [vmem:[%s3 + $0x1c8] sm:$0xff] %vm110, %v1800
  %1897 = vst [vmem:[%s3 + $0x1d0] sm:$0xff] %v1801
  %1898 = vst.msk [vmem:[%s3 + $0x1d8] sm:$0xff] %vm110, %v1802
  %1899 = vst [vmem:[%s3 + $0x1e0] sm:$0xff] %v1803
  %1900 = vst.msk [vmem:[%s3 + $0x1e8] sm:$0xff] %vm110, %v1804
  %1901 = vst [vmem:[%s3 + $0x1f0] sm:$0xff] %v1805
  %1902 = vst.msk [vmem:[%s3 + $0x1f8] sm:$0xff] %vm110, %v1806
  %1903 = vst [vmem:[%s3 + $0x200] sm:$0xff] %v1807
  %1904 = vst.msk [vmem:[%s3 + $0x208] sm:$0xff] %vm110, %v1808
  %1905 = vst [vmem:[%s3 + $0x210] sm:$0xff] %v1809
  %1906 = vst.msk [vmem:[%s3 + $0x218] sm:$0xff] %vm110, %v1810
  %1907 = vst [vmem:[%s3 + $0x220] sm:$0xff] %v1811
  %1908 = vst.msk [vmem:[%s3 + $0x228] sm:$0xff] %vm110, %v1812
  %1909 = vst [vmem:[%s3 + $0x230] sm:$0xff] %v1813
  %1910 = vst.msk [vmem:[%s3 + $0x238] sm:$0xff] %vm110, %v1814
  %1911 = vst [vmem:[%s3 + $0x240] sm:$0xff] %v1815
  %1912 = vst.msk [vmem:[%s3 + $0x248] sm:$0xff] %vm110, %v1816
  %1913 = vst [vmem:[%s3 + $0x250] sm:$0xff] %v1817
  %1914 = vst.msk [vmem:[%s3 + $0x258] sm:$0xff] %vm110, %v1818
  %1915 = vst [vmem:[%s3 + $0x260] sm:$0xff] %v1819
  %1916 = vst.msk [vmem:[%s3 + $0x268] sm:$0xff] %vm110, %v1820
  %1917 = vst [vmem:[%s3 + $0x270] sm:$0xff] %v1821
  %1918 = vst.msk [vmem:[%s3 + $0x278] sm:$0xff] %vm110, %v1822
  %1919 = vst [vmem:[%s3 + $0x280] sm:$0xff] %v1823
  %1920 = vst.msk [vmem:[%s3 + $0x288] sm:$0xff] %vm110, %v1824
  %1921 = vst [vmem:[%s3 + $0x290] sm:$0xff] %v1825
  %1922 = vst.msk [vmem:[%s3 + $0x298] sm:$0xff] %vm110, %v1826
  %1923 = vst [vmem:[%s3 + $0x2a0] sm:$0xff] %v1827
  %1924 = vst.msk [vmem:[%s3 + $0x2a8] sm:$0xff] %vm110, %v1828
  %1925 = vst [vmem:[%s3 + $0x2b0] sm:$0xff] %v1829
  %1926 = vst.msk [vmem:[%s3 + $0x2b8] sm:$0xff] %vm110, %v1830
  %1927 = vst [vmem:[%s3 + $0x2c0] sm:$0xff] %v1831
  %1928 = vst.msk [vmem:[%s3 + $0x2c8] sm:$0xff] %vm110, %v1832
  %1929 = vst [vmem:[%s3 + $0x2d0] sm:$0xff] %v1833
  %1930 = vst.msk [vmem:[%s3 + $0x2d8] sm:$0xff] %vm110, %v1834
  %1931 = vst [vmem:[%s3 + $0x2e0] sm:$0xff] %v1835
  %1932 = vst.msk [vmem:[%s3 + $0x2e8] sm:$0xff] %vm110, %v1836
  %1933 = vst [vmem:[%s3 + $0x2f0] sm:$0xff] %v1837
  %1934 = vst.msk [vmem:[%s3 + $0x2f8] sm:$0xff] %vm110, %v1838
  // Predicated region
  $region14: #{tpu_custom_call.1} parent=0 // pred_check
    _
  $region15: #{tpu_custom_call.1} parent=0 // pred_check_branch
    %1936 = sbr.rel (0) target = $region17
  $region16: #{tpu_custom_call.1} parent=0 // pred_region
    _
  $region17: #{tpu_custom_call.1} parent=0 // pred_fallthru
    _
  // Predicated region
  $region18: #{tpu_custom_call.1} parent=0 // pred_check
    _
  $region19: #{tpu_custom_call.1} parent=0 // pred_check_branch
    %1938 = sbr.rel (0) target = $region21
  $region20: #{tpu_custom_call.1} parent=0 // pred_region
    _
  $region21: #{tpu_custom_call.1} parent=0 // pred_fallthru
    _

</llo_original>
